<compile_context>
chip_gen: v5e
topology: v5e:2x2
jax: 0.10.0
libtpu: 0.0.40
codegen_flags: <defaults>
</compile_context>

<pallas_src>
import functools

import numpy as np

import jax
import jax.numpy as jnp
from jax.experimental import pallas as pl
from jax.experimental.pallas import tpu as pltpu


def _moe_router_kernel(x_ref, w_ref, b_ref,
                       logits_ref, weights_kn_ref, selected_kn_ref, mask_ref,
                       *, top_k, logits_token_on_lane):
    x = x_ref[...]                                   # (TN, d), f32 or bf16
    w = w_ref[...]                                   # (E, d) torch layout, never transposed
    b_col = b_ref[...].astype(jnp.float32)           # (E, 1)

    tn = x.shape[0]
    e = w.shape[0]

    # Single matmul, token-on-lane orientation: logits_t[e, t] = sum_d W[e,d]*x[t,d].
    # f32 accumulation on the MXU regardless of the input dtype.
    logits_t = jax.lax.dot_general(
        w, x, dimension_numbers=(((1,), (1,)), ((), ())),
        preferred_element_type=jnp.float32) + b_col                  # (E, TN)

    if logits_token_on_lane:
        # E < 128: emit lane-dense (E, TN); wrapper transposes the small (N, E).
        logits_ref[...] = logits_t.astype(logits_ref.dtype)
    else:
        # E >= 128: (TN, E) store is already lane-dense; in-kernel transpose keeps
        # router_logits and the top-k consistent (same accumulation, one matmul).
        logits_ref[...] = logits_t.T.astype(logits_ref.dtype)

    sub_iota = jax.lax.broadcasted_iota(jnp.int32, (e, tn), 0)       # hoisted once

    # Iterative top-k over the expert (sublane) axis; top_k is small & static.
    scores = logits_t
    vals, idxs = [], []
    for _ in range(top_k):
        mx = jnp.max(scores, axis=0, keepdims=True)                  # (1, TN)
        # Lowest expert index wins on exact ties (matches lax.top_k).
        # NOTE: an all-NaN token column would silently yield index == e.
        idx = jnp.min(jnp.where(scores == mx, sub_iota, e), axis=0,
                      keepdims=True).astype(jnp.int32)               # (1, TN)
        vals.append(mx)
        idxs.append(idx)
        scores = jnp.where(sub_iota == idx, -jnp.inf, scores)

    # Renormalized top-k softmax weights: softmax is monotone in the logits and
    # its denominator cancels under renormalization, so only exp(v_k - v_0) over
    # the K selected rows is needed (the full (TN, E) softmax never exists).
    exps = [jnp.exp(v - vals[0]) for v in vals]                      # (1, TN) each
    total = exps[0]
    for t in exps[1:]:
        total = total + t
    inv_total = 1.0 / total          # exact divide (approx reciprocal would break 2e-5 tol)
    w_rows = [t * inv_total for t in exps]

    # Lane-dense batched stores for the small outputs: (K, TN).
    weights_kn_ref[...] = jnp.concatenate(w_rows, axis=0).astype(weights_kn_ref.dtype)
    idx_kn = jnp.concatenate(idxs, axis=0)                           # (K, TN) i32
    selected_kn_ref[...] = idx_kn

    # expert_mask emitted flattened as (E*K, TN) with row r = e_idx*K + k_idx:
    # mask[r, t] = 1 iff r == selected[k, t]*K + k for some k (only k = r % K can
    # match), so K broadcast-compares against (1, TN) rows build it directly in
    # the final layout: no reshape/relayout and no K->8 sublane padding.
    row_iota = jax.lax.broadcasted_iota(jnp.int32, (e * top_k, tn), 0)
    k_iota = jax.lax.broadcasted_iota(jnp.int32, (top_k, tn), 0)
    flat_tgt = idx_kn * top_k + k_iota                               # (K, TN)
    m = row_iota == flat_tgt[0:1, :]
    for kk in range(1, top_k):
        m = m | (row_iota == flat_tgt[kk:kk + 1, :])
    mask_ref[...] = m.astype(mask_ref.dtype)


def _vmem_plan(n, d, e, k, *, x_itemsize, w_itemsize, mask_itemsize,
               token_tile, vmem_limit_bytes, single_buffer_weights):
    """Pick (token_tile, n_pad, vmem_limit_bytes), generation-aware.

    v5e/v6e (128 MiB physical VMEM): raise the scoped limit to 96 MiB so the
    token tile reaches the >=512 HBM-roofline knee.  v7x (64 MiB physical,
    32 MiB scoped default): keep the default and trim the budget instead."""
    try:
        vmem_cap = pltpu.get_tpu_info().vmem_capacity_bytes
    except Exception:                              # no hw info (interpret mode, etc.)
        vmem_cap = 64 * 1024 * 1024
    if vmem_limit_bytes is None and vmem_cap >= 96 * 1024 * 1024:
        vmem_limit_bytes = 96 * 1024 * 1024        # v5e / v6e: lift the 32 MiB default
    budget = vmem_limit_bytes if vmem_limit_bytes is not None else 28 * 1024 * 1024
    budget = int(budget * 0.85)                    # headroom for compiler scratch

    weight_bufs = 1 if single_buffer_weights else 2
    resident = weight_bufs * e * d * w_itemsize + 4 * e              # gate weight + bias
    per_token = (2 * (d * x_itemsize + e * 4 + 2 * k * 4 + e * k * mask_itemsize)  # dbl-buffered I/O
                 + 3 * e * 4 + 5 * e * k)                            # in-kernel temporaries

    if token_tile is None:
        tn = (budget - resident) // max(per_token, 1)
        tn = max(128, min(4096, tn))
        tn = (tn // 128) * 128
    else:
        tn = int(token_tile)

    if n <= tn:
        return n, n, vmem_limit_bytes              # single tile: any N is a legal block

    tn = max(128, (tn // 128) * 128)               # tiled path: lane-dense over tokens
    if n % tn != 0 and n % 128 == 0:
        # Prefer a tile that divides N: avoids padding and the wrapper-side
        # expert_mask[..., :n] slice (a full HBM copy of the largest output).
        t = tn
        while t > 128 and n % t != 0:
            t -= 128
        tn = t
    n_pad = pl.cdiv(n, tn) * tn
    return tn, n_pad, vmem_limit_bytes


def moe_router(hidden_states, gate_weight, gate_bias, top_k, *,
               token_tile=None, vmem_limit_bytes=None, mask_dtype=jnp.int8,
               single_buffer_weights=True):
    """hidden_states: (N, d) f32/bf16; gate_weight: (E, d) torch layout; gate_bias: (E,)."""
    n, d = hidden_states.shape
    e = gate_weight.shape[0]
    k = int(top_k)
    logits_token_on_lane = e < 128                 # else (TN, E) stores are already lane-dense

    tn, n_pad, vmem_limit_bytes = _vmem_plan(
        n, d, e, k,
        x_itemsize=hidden_states.dtype.itemsize,
        w_itemsize=gate_weight.dtype.itemsize,
        mask_itemsize=np.dtype(mask_dtype).itemsize,
        token_tile=token_tile, vmem_limit_bytes=vmem_limit_bytes,
        single_buffer_weights=single_buffer_weights)

    x = hidden_states
    if n_pad != n:
        # Ragged last tile: pad with zeros; padded tokens are sliced away below.
        x = jnp.pad(hidden_states, ((0, n_pad - n), (0, 0)))

    grid = (n_pad // tn,)
    kernel = functools.partial(_moe_router_kernel, top_k=k,
                               logits_token_on_lane=logits_token_on_lane)

    if logits_token_on_lane:
        logits_shape = jax.ShapeDtypeStruct((e, n_pad), jnp.float32)
        logits_spec = pl.BlockSpec((e, tn), lambda i: (0, i))
    else:
        logits_shape = jax.ShapeDtypeStruct((n_pad, e), jnp.float32)
        logits_spec = pl.BlockSpec((tn, e), lambda i: (i, 0))

    out_shapes = (
        logits_shape,                                       # router_logits
        jax.ShapeDtypeStruct((k, n_pad), jnp.float32),      # router_weights (K, N)
        jax.ShapeDtypeStruct((k, n_pad), jnp.int32),        # selected_experts (K, N)
        jax.ShapeDtypeStruct((e * k, n_pad), mask_dtype),   # expert_mask flattened (E*K, N)
    )
    out_specs = (
        logits_spec,
        pl.BlockSpec((k, tn), lambda i: (0, i)),
        pl.BlockSpec((k, tn), lambda i: (0, i)),
        pl.BlockSpec((e * k, tn), lambda i: (0, i)),
    )

    compiler_params = pltpu.CompilerParams(
        dimension_semantics=("parallel",),                  # megacore sharding on v7x
        vmem_limit_bytes=vmem_limit_bytes)

    x_spec = pl.BlockSpec((tn, d), lambda i: (i, 0))        # x: tiled over tokens
    b_spec = pl.BlockSpec((e, 1), lambda i: (0, 0))         # bias: VMEM-resident column

    def _run(buffered_once):
        if buffered_once:
            # Constant index_map => never re-DMA'd across the grid; a single buffer
            # halves the resident-weight VMEM (matters inside v7x's 64 MiB).
            w_spec = pl.BlockSpec((e, d), lambda i: (0, 0),
                                  pipeline_mode=pl.Buffered(1))
        else:
            w_spec = pl.BlockSpec((e, d), lambda i: (0, 0))
        return pl.pallas_call(
            kernel,
            out_shape=out_shapes,
            grid=grid,
            in_specs=[x_spec, w_spec, b_spec],
            out_specs=out_specs,
            compiler_params=compiler_params,
        )(x, gate_weight, gate_bias.reshape(e, 1))

    if single_buffer_weights:
        try:
            outs = _run(True)
        except Exception:          # jax builds without pipeline_mode / Buffered(1)
            outs = _run(False)
    else:
        outs = _run(False)
    logits_out, weights_kn, selected_kn, mask_flat = outs

    # Tiny layout fixes on the small outputs only; the mask reshape is free.
    router_logits = jnp.transpose(logits_out) if logits_token_on_lane else logits_out
    router_weights = jnp.transpose(weights_kn)              # (N, K)
    selected_experts = jnp.transpose(selected_kn)           # (N, K)
    expert_mask = mask_flat.reshape(e, k, n_pad)            # (E, K, N) same row-major layout

    if n_pad != n:
        router_logits = router_logits[:n]
        router_weights = router_weights[:n]
        selected_experts = selected_experts[:n]
        expert_mask = expert_mask[..., :n]                  # only when no 128-multiple tile divides N

    return router_logits, router_weights, selected_experts, expert_mask


def _reference(hidden_states, gate_weight, gate_bias, top_k):
    logits = hidden_states @ gate_weight.T + gate_bias
    probs = jax.nn.softmax(logits, axis=-1)
    w, idx = jax.lax.top_k(probs, top_k)
    w = w / jnp.sum(w, axis=-1, keepdims=True)
    mask = jax.nn.one_hot(idx, gate_weight.shape[0], dtype=jnp.int32)
    mask = jnp.transpose(mask, (2, 1, 0))
    return logits, w, idx.astype(jnp.int32), mask


if __name__ == "__main__":
    # Small shapes: 256 tokens, d=32, 8 experts, top_k=2.  token_tile=128 so
    # the grid really has 2 pipelined steps (exercises the tiled path).
    n, d, e, k = 256, 32, 8, 2

    key = jax.random.PRNGKey(0)
    kx, kw, kb = jax.random.split(key, 3)
    hidden_states = jax.random.normal(kx, (n, d), dtype=jnp.float32)
    bound = 1.0 / (d ** 0.5)                      # nn.Linear default init range
    gate_weight = jax.random.uniform(kw, (e, d), jnp.float32, -bound, bound)
    gate_bias = jax.random.uniform(kb, (e,), jnp.float32, -bound, bound)

    outs = moe_router(hidden_states, gate_weight, gate_bias, k, token_tile=128)
    outs = jax.block_until_ready(outs)
    logits, weights, selected, expert_mask = outs

    # sanity check against a plain-JAX reference
    r_logits, r_weights, r_selected, r_mask = _reference(
        hidden_states, gate_weight, gate_bias, k)
    assert logits.shape == (n, e) and weights.shape == (n, k)
    assert selected.shape == (n, k) and expert_mask.shape == (e, k, n)
    assert jnp.allclose(logits, r_logits, atol=2e-5, rtol=2e-5)
    assert jnp.allclose(weights, r_weights, atol=2e-5, rtol=2e-5)
    assert jnp.array_equal(selected, r_selected)
    assert jnp.array_equal(expert_mask.astype(jnp.int32), r_mask)

    # bf16 inputs are accepted without upcasting (f32 MXU accumulation); this
    # also exercises the auto token-tile / VMEM plan (single tile here).
    outs_bf16 = moe_router(hidden_states.astype(jnp.bfloat16),
                           gate_weight.astype(jnp.bfloat16), gate_bias, k)
    outs_bf16 = jax.block_until_ready(outs_bf16)
    assert outs_bf16[0].shape == (n, e) and outs_bf16[3].dtype == jnp.int8
    assert bool(jnp.all((outs_bf16[2] >= 0) & (outs_bf16[2] < e)))

    print("KERNEL_OK")
</pallas_src>

<mosaic_0001>
module attributes {stable_mosaic.version = 11 : i64} {
  func.func @_moe_router_kernel(%arg0: i32, %arg1: memref<128x32xf32, #tpu.memory_space<vmem>>, %arg2: memref<8x32xf32, #tpu.memory_space<vmem>>, %arg3: memref<8x1xf32, #tpu.memory_space<vmem>>, %arg4: memref<8x128xf32, #tpu.memory_space<vmem>>, %arg5: memref<2x128xf32, #tpu.memory_space<vmem>>, %arg6: memref<2x128xi32, #tpu.memory_space<vmem>>, %arg7: memref<16x128xi8, #tpu.memory_space<vmem>>) attributes {dimension_semantics = [#tpu.dimension_semantics<parallel>], iteration_bounds = array<i64: 2>, scalar_prefetch = 0 : i64, scratch_operands = 0 : i64, tpu.core_type = #tpu.core_type<tc>, window_params = [{transform_indices = @transform_0, window_bounds = array<i64: 128, 32>}, {pipeline_mode = #tpu.pipeline_mode<synchronous>, transform_indices = @transform_1, window_bounds = array<i64: 8, 32>}, {pipeline_mode = #tpu.pipeline_mode<synchronous>, transform_indices = @transform_2, window_bounds = array<i64: 8, 1>}, {transform_indices = @transform_3, window_bounds = array<i64: 8, 128>}, {transform_indices = @transform_4, window_bounds = array<i64: 2, 128>}, {transform_indices = @transform_5, window_bounds = array<i64: 2, 128>}, {transform_indices = @transform_6, window_bounds = array<i64: 16, 128>}]} {
    %c0 = arith.constant 0 : index
    %c0_0 = arith.constant 0 : index
    %0 = vector.load %arg1[%c0, %c0_0] : memref<128x32xf32, #tpu.memory_space<vmem>>, vector<128x32xf32>
    %c0_1 = arith.constant 0 : index
    %c0_2 = arith.constant 0 : index
    %1 = vector.load %arg2[%c0_1, %c0_2] : memref<8x32xf32, #tpu.memory_space<vmem>>, vector<8x32xf32>
    %c0_3 = arith.constant 0 : index
    %c0_4 = arith.constant 0 : index
    %2 = vector.load %arg3[%c0_3, %c0_4] : memref<8x1xf32, #tpu.memory_space<vmem>>, vector<8x1xf32>
    %cst = arith.constant dense<0.000000e+00> : vector<8x128xf32>
    %3 = tpu.matmul %1, %0, %cst {dimension_numbers = #tpu.dot_dimension_numbers<[1], [1], [0], [0], [0, 0, 1, 0], [], []>} : vector<8x32xf32>, vector<128x32xf32>, vector<8x128xf32> -> vector<8x128xf32>
    %4 = vector.broadcast %2 : vector<8x1xf32> to vector<8x128xf32>
    %5 = arith.addf %3, %4 : vector<8x128xf32>
    %c0_5 = arith.constant 0 : index
    %c0_6 = arith.constant 0 : index
    %6 = vector.load %arg4[%c0_5, %c0_6] : memref<8x128xf32, #tpu.memory_space<vmem>>, vector<8x128xf32>
    tpu.vector_store %arg4[%c0_5, %c0_6], %5 {strides = array<i32>} : memref<8x128xf32, #tpu.memory_space<vmem>>, vector<8x128xf32>,
    %7 = tpu.iota {dimensions = array<i32: 0>} : vector<8x128xi32>
    %cst_7 = arith.constant dense<0xFF800000> : vector<128xf32>
    %8 = vector.multi_reduction <maximumf>, %5, %cst_7 [0] : vector<8x128xf32> to vector<128xf32>
    %9 = vector.shape_cast %8 : vector<128xf32> to vector<1x128xf32>
    %10 = vector.broadcast %9 : vector<1x128xf32> to vector<8x128xf32>
    %11 = arith.cmpf oeq, %5, %10 : vector<8x128xf32>
    %c8_i32 = arith.constant 8 : i32
    %12 = vector.broadcast %c8_i32 : i32 to vector<8x128xi32>
    %13 = arith.select %11, %7, %12 : vector<8x128xi1>, vector<8x128xi32>
    %cst_8 = arith.constant dense<2147483647> : vector<128xi32>
    %14 = vector.multi_reduction <minsi>, %13, %cst_8 [0] : vector<8x128xi32> to vector<128xi32>
    %15 = vector.shape_cast %14 : vector<128xi32> to vector<1x128xi32>
    %16 = vector.broadcast %15 : vector<1x128xi32> to vector<8x128xi32>
    %17 = arith.cmpi eq, %7, %16 : vector<8x128xi32>
    %cst_9 = arith.constant 0xFF800000 : f32
    %18 = vector.broadcast %cst_9 : f32 to vector<8x128xf32>
    %19 = arith.select %17, %18, %5 : vector<8x128xi1>, vector<8x128xf32>
    %cst_10 = arith.constant dense<0xFF800000> : vector<128xf32>
    %20 = vector.multi_reduction <maximumf>, %19, %cst_10 [0] : vector<8x128xf32> to vector<128xf32>
    %21 = vector.shape_cast %20 : vector<128xf32> to vector<1x128xf32>
    %22 = vector.broadcast %21 : vector<1x128xf32> to vector<8x128xf32>
    %23 = arith.cmpf oeq, %19, %22 : vector<8x128xf32>
    %c8_i32_11 = arith.constant 8 : i32
    %24 = vector.broadcast %c8_i32_11 : i32 to vector<8x128xi32>
    %25 = arith.select %23, %7, %24 : vector<8x128xi1>, vector<8x128xi32>
    %cst_12 = arith.constant dense<2147483647> : vector<128xi32>
    %26 = vector.multi_reduction <minsi>, %25, %cst_12 [0] : vector<8x128xi32> to vector<128xi32>
    %27 = vector.shape_cast %26 : vector<128xi32> to vector<1x128xi32>
    %28 = arith.subf %9, %9 : vector<1x128xf32>
    %29 = math.exp %28 : vector<1x128xf32>
    %30 = arith.subf %21, %9 : vector<1x128xf32>
    %31 = math.exp %30 : vector<1x128xf32>
    %32 = arith.addf %29, %31 : vector<1x128xf32>
    %cst_13 = arith.constant 1.000000e+00 : f32
    %33 = vector.broadcast %cst_13 : f32 to vector<1x128xf32>
    %34 = arith.divf %33, %32 : vector<1x128xf32>
    %35 = arith.mulf %29, %34 : vector<1x128xf32>
    %36 = arith.mulf %31, %34 : vector<1x128xf32>
    %37 = tpu.concatenate %35, %36 in 0 : vector<1x128xf32>, vector<1x128xf32> -> vector<2x128xf32>
    %c0_14 = arith.constant 0 : index
    %c0_15 = arith.constant 0 : index
    %38 = vector.load %arg5[%c0_14, %c0_15] : memref<2x128xf32, #tpu.memory_space<vmem>>, vector<2x128xf32>
    tpu.vector_store %arg5[%c0_14, %c0_15], %37 {strides = array<i32>} : memref<2x128xf32, #tpu.memory_space<vmem>>, vector<2x128xf32>,
    %39 = tpu.concatenate %15, %27 in 0 : vector<1x128xi32>, vector<1x128xi32> -> vector<2x128xi32>
    %c0_16 = arith.constant 0 : index
    %c0_17 = arith.constant 0 : index
    %40 = vector.load %arg6[%c0_16, %c0_17] : memref<2x128xi32, #tpu.memory_space<vmem>>, vector<2x128xi32>
    tpu.vector_store %arg6[%c0_16, %c0_17], %39 {strides = array<i32>} : memref<2x128xi32, #tpu.memory_space<vmem>>, vector<2x128xi32>,
    %41 = tpu.iota {dimensions = array<i32: 0>} : vector<16x128xi32>
    %42 = tpu.iota {dimensions = array<i32: 0>} : vector<2x128xi32>
    %c2_i32 = arith.constant 2 : i32
    %43 = vector.broadcast %c2_i32 : i32 to vector<2x128xi32>
    %44 = arith.muli %39, %43 : vector<2x128xi32>
    %45 = arith.addi %44, %42 : vector<2x128xi32>
    %46 = vector.extract_strided_slice %45 {offsets = [0, 0], sizes = [1, 128], strides = [1, 1]} : vector<2x128xi32> to vector<1x128xi32>
    %47 = vector.broadcast %46 : vector<1x128xi32> to vector<16x128xi32>
    %48 = arith.cmpi eq, %41, %47 : vector<16x128xi32>
    %49 = vector.extract_strided_slice %45 {offsets = [1, 0], sizes = [1, 128], strides = [1, 1]} : vector<2x128xi32> to vector<1x128xi32>
    %50 = vector.broadcast %49 : vector<1x128xi32> to vector<16x128xi32>
    %51 = arith.cmpi eq, %41, %50 : vector<16x128xi32>
    %52 = arith.ori %48, %51 : vector<16x128xi1>
    %53 = arith.extui %52 : vector<16x128xi1> to vector<16x128xi8>
    %c0_18 = arith.constant 0 : index
    %c0_19 = arith.constant 0 : index
    %54 = vector.load %arg7[%c0_18, %c0_19] : memref<16x128xi8, #tpu.memory_space<vmem>>, vector<16x128xi8>
    tpu.vector_store %arg7[%c0_18, %c0_19], %53 {strides = array<i32>} : memref<16x128xi8, #tpu.memory_space<vmem>>, vector<16x128xi8>,
    return
  }
  func.func @transform_0(%arg0: i32) -> (i32, i32) {
    %c0_i32 = arith.constant 0 : i32
    %c0_i32_0 = arith.constant 0 : i32
    return %arg0, %c0_i32 : i32, i32
  }
  func.func @transform_1(%arg0: i32) -> (i32, i32) {
    %c0_i32 = arith.constant 0 : i32
    %c0_i32_0 = arith.constant 0 : i32
    %c0_i32_1 = arith.constant 0 : i32
    return %c0_i32, %c0_i32_0 : i32, i32
  }
  func.func @transform_2(%arg0: i32) -> (i32, i32) {
    %c0_i32 = arith.constant 0 : i32
    %c0_i32_0 = arith.constant 0 : i32
    %c0_i32_1 = arith.constant 0 : i32
    return %c0_i32, %c0_i32_0 : i32, i32
  }
  func.func @transform_3(%arg0: i32) -> (i32, i32) {
    %c0_i32 = arith.constant 0 : i32
    %c0_i32_0 = arith.constant 0 : i32
    return %c0_i32, %arg0 : i32, i32
  }
  func.func @transform_4(%arg0: i32) -> (i32, i32) {
    %c0_i32 = arith.constant 0 : i32
    %c0_i32_0 = arith.constant 0 : i32
    return %c0_i32, %arg0 : i32, i32
  }
  func.func @transform_5(%arg0: i32) -> (i32, i32) {
    %c0_i32 = arith.constant 0 : i32
    %c0_i32_0 = arith.constant 0 : i32
    return %c0_i32, %arg0 : i32, i32
  }
  func.func @transform_6(%arg0: i32) -> (i32, i32) {
    %c0_i32 = arith.constant 0 : i32
    %c0_i32_0 = arith.constant 0 : i32
    return %c0_i32, %arg0 : i32, i32
  }
}

module attributes {stable_mosaic.version = 11 : i64} {
  func.func @_moe_router_kernel(%arg0: i32, %arg1: memref<128x32xf32, #tpu.memory_space<vmem>>, %arg2: memref<8x32xf32, #tpu.memory_space<vmem>>, %arg3: memref<8x1xf32, #tpu.memory_space<vmem>>, %arg4: memref<8x128xf32, #tpu.memory_space<vmem>>, %arg5: memref<2x128xf32, #tpu.memory_space<vmem>>, %arg6: memref<2x128xi32, #tpu.memory_space<vmem>>, %arg7: memref<16x128xi8, #tpu.memory_space<vmem>>) attributes {dimension_semantics = [#tpu.dimension_semantics<parallel>], iteration_bounds = array<i64: 2>, scalar_prefetch = 0 : i64, scratch_operands = 0 : i64, tpu.core_type = #tpu.core_type<tc>, window_params = [{transform_indices = @transform_0, window_bounds = array<i64: 128, 32>}, {pipeline_mode = #tpu.pipeline_mode<synchronous>, transform_indices = @transform_1, window_bounds = array<i64: 8, 32>}, {pipeline_mode = #tpu.pipeline_mode<synchronous>, transform_indices = @transform_2, window_bounds = array<i64: 8, 1>}, {transform_indices = @transform_3, window_bounds = array<i64: 8, 128>}, {transform_indices = @transform_4, window_bounds = array<i64: 2, 128>}, {transform_indices = @transform_5, window_bounds = array<i64: 2, 128>}, {transform_indices = @transform_6, window_bounds = array<i64: 16, 128>}]} {
    %c0 = arith.constant 0 : index
    %c0_0 = arith.constant 0 : index
    %0 = vector.load %arg1[%c0, %c0_0] : memref<128x32xf32, #tpu.memory_space<vmem>>, vector<128x32xf32>
    %c0_1 = arith.constant 0 : index
    %c0_2 = arith.constant 0 : index
    %1 = vector.load %arg2[%c0_1, %c0_2] : memref<8x32xf32, #tpu.memory_space<vmem>>, vector<8x32xf32>
    %c0_3 = arith.constant 0 : index
    %c0_4 = arith.constant 0 : index
    %2 = vector.load %arg3[%c0_3, %c0_4] : memref<8x1xf32, #tpu.memory_space<vmem>>, vector<8x1xf32>
    %cst = arith.constant dense<0.000000e+00> : vector<8x128xf32>
    %3 = tpu.matmul %1, %0, %cst {dimension_numbers = #tpu.dot_dimension_numbers<[1], [1], [0], [0], [0, 0, 1, 0], [], []>} : vector<8x32xf32>, vector<128x32xf32>, vector<8x128xf32> -> vector<8x128xf32>
    %4 = vector.broadcast %2 : vector<8x1xf32> to vector<8x128xf32>
    %5 = arith.addf %3, %4 : vector<8x128xf32>
    %c0_5 = arith.constant 0 : index
    %c0_6 = arith.constant 0 : index
    %6 = vector.load %arg4[%c0_5, %c0_6] : memref<8x128xf32, #tpu.memory_space<vmem>>, vector<8x128xf32>
    tpu.vector_store %arg4[%c0_5, %c0_6], %5 {strides = array<i32>} : memref<8x128xf32, #tpu.memory_space<vmem>>, vector<8x128xf32>,
    %7 = tpu.iota {dimensions = array<i32: 0>} : vector<8x128xi32>
    %cst_7 = arith.constant dense<0xFF800000> : vector<128xf32>
    %8 = vector.multi_reduction <maximumf>, %5, %cst_7 [0] : vector<8x128xf32> to vector<128xf32>
    %9 = vector.shape_cast %8 : vector<128xf32> to vector<1x128xf32>
    %10 = vector.broadcast %9 : vector<1x128xf32> to vector<8x128xf32>
    %11 = arith.cmpf oeq, %5, %10 : vector<8x128xf32>
    %c8_i32 = arith.constant 8 : i32
    %12 = vector.broadcast %c8_i32 : i32 to vector<8x128xi32>
    %13 = arith.select %11, %7, %12 : vector<8x128xi1>, vector<8x128xi32>
    %cst_8 = arith.constant dense<2147483647> : vector<128xi32>
    %14 = vector.multi_reduction <minsi>, %13, %cst_8 [0] : vector<8x128xi32> to vector<128xi32>
    %15 = vector.shape_cast %14 : vector<128xi32> to vector<1x128xi32>
    %16 = vector.broadcast %15 : vector<1x128xi32> to vector<8x128xi32>
    %17 = arith.cmpi eq, %7, %16 : vector<8x128xi32>
    %cst_9 = arith.constant 0xFF800000 : f32
    %18 = vector.broadcast %cst_9 : f32 to vector<8x128xf32>
    %19 = arith.select %17, %18, %5 : vector<8x128xi1>, vector<8x128xf32>
    %cst_10 = arith.constant dense<0xFF800000> : vector<128xf32>
    %20 = vector.multi_reduction <maximumf>, %19, %cst_10 [0] : vector<8x128xf32> to vector<128xf32>
    %21 = vector.shape_cast %20 : vector<128xf32> to vector<1x128xf32>
    %22 = vector.broadcast %21 : vector<1x128xf32> to vector<8x128xf32>
    %23 = arith.cmpf oeq, %19, %22 : vector<8x128xf32>
    %c8_i32_11 = arith.constant 8 : i32
    %24 = vector.broadcast %c8_i32_11 : i32 to vector<8x128xi32>
    %25 = arith.select %23, %7, %24 : vector<8x128xi1>, vector<8x128xi32>
    %cst_12 = arith.constant dense<2147483647> : vector<128xi32>
    %26 = vector.multi_reduction <minsi>, %25, %cst_12 [0] : vector<8x128xi32> to vector<128xi32>
    %27 = vector.shape_cast %26 : vector<128xi32> to vector<1x128xi32>
    %28 = arith.subf %9, %9 : vector<1x128xf32>
    %29 = math.exp %28 : vector<1x128xf32>
    %30 = arith.subf %21, %9 : vector<1x128xf32>
    %31 = math.exp %30 : vector<1x128xf32>
    %32 = arith.addf %29, %31 : vector<1x128xf32>
    %cst_13 = arith.constant 1.000000e+00 : f32
    %33 = vector.broadcast %cst_13 : f32 to vector<1x128xf32>
    %34 = arith.divf %33, %32 : vector<1x128xf32>
    %35 = arith.mulf %29, %34 : vector<1x128xf32>
    %36 = arith.mulf %31, %34 : vector<1x128xf32>
    %37 = tpu.concatenate %35, %36 in 0 : vector<1x128xf32>, vector<1x128xf32> -> vector<2x128xf32>
    %c0_14 = arith.constant 0 : index
    %c0_15 = arith.constant 0 : index
    %38 = vector.load %arg5[%c0_14, %c0_15] : memref<2x128xf32, #tpu.memory_space<vmem>>, vector<2x128xf32>
    tpu.vector_store %arg5[%c0_14, %c0_15], %37 {strides = array<i32>} : memref<2x128xf32, #tpu.memory_space<vmem>>, vector<2x128xf32>,
    %39 = tpu.concatenate %15, %27 in 0 : vector<1x128xi32>, vector<1x128xi32> -> vector<2x128xi32>
    %c0_16 = arith.constant 0 : index
    %c0_17 = arith.constant 0 : index
    %40 = vector.load %arg6[%c0_16, %c0_17] : memref<2x128xi32, #tpu.memory_space<vmem>>, vector<2x128xi32>
    tpu.vector_store %arg6[%c0_16, %c0_17], %39 {strides = array<i32>} : memref<2x128xi32, #tpu.memory_space<vmem>>, vector<2x128xi32>,
    %41 = tpu.iota {dimensions = array<i32: 0>} : vector<16x128xi32>
    %42 = tpu.iota {dimensions = array<i32: 0>} : vector<2x128xi32>
    %c2_i32 = arith.constant 2 : i32
    %43 = vector.broadcast %c2_i32 : i32 to vector<2x128xi32>
    %44 = arith.muli %39, %43 : vector<2x128xi32>
    %45 = arith.addi %44, %42 : vector<2x128xi32>
    %46 = vector.extract_strided_slice %45 {offsets = [0, 0], sizes = [1, 128], strides = [1, 1]} : vector<2x128xi32> to vector<1x128xi32>
    %47 = vector.broadcast %46 : vector<1x128xi32> to vector<16x128xi32>
    %48 = arith.cmpi eq, %41, %47 : vector<16x128xi32>
    %49 = vector.extract_strided_slice %45 {offsets = [1, 0], sizes = [1, 128], strides = [1, 1]} : vector<2x128xi32> to vector<1x128xi32>
    %50 = vector.broadcast %49 : vector<1x128xi32> to vector<16x128xi32>
    %51 = arith.cmpi eq, %41, %50 : vector<16x128xi32>
    %52 = arith.ori %48, %51 : vector<16x128xi1>
    %53 = arith.extui %52 : vector<16x128xi1> to vector<16x128xi8>
    %c0_18 = arith.constant 0 : index
    %c0_19 = arith.constant 0 : index
    %54 = vector.load %arg7[%c0_18, %c0_19] : memref<16x128xi8, #tpu.memory_space<vmem>>, vector<16x128xi8>
    tpu.vector_store %arg7[%c0_18, %c0_19], %53 {strides = array<i32>} : memref<16x128xi8, #tpu.memory_space<vmem>>, vector<16x128xi8>,
    return
  }
  func.func @transform_0(%arg0: i32) -> (i32, i32) {
    %c0_i32 = arith.constant 0 : i32
    %c0_i32_0 = arith.constant 0 : i32
    return %arg0, %c0_i32 : i32, i32
  }
  func.func @transform_1(%arg0: i32) -> (i32, i32) {
    %c0_i32 = arith.constant 0 : i32
    %c0_i32_0 = arith.constant 0 : i32
    %c0_i32_1 = arith.constant 0 : i32
    return %c0_i32, %c0_i32_0 : i32, i32
  }
  func.func @transform_2(%arg0: i32) -> (i32, i32) {
    %c0_i32 = arith.constant 0 : i32
    %c0_i32_0 = arith.constant 0 : i32
    %c0_i32_1 = arith.constant 0 : i32
    return %c0_i32, %c0_i32_0 : i32, i32
  }
  func.func @transform_3(%arg0: i32) -> (i32, i32) {
    %c0_i32 = arith.constant 0 : i32
    %c0_i32_0 = arith.constant 0 : i32
    return %c0_i32, %arg0 : i32, i32
  }
  func.func @transform_4(%arg0: i32) -> (i32, i32) {
    %c0_i32 = arith.constant 0 : i32
    %c0_i32_0 = arith.constant 0 : i32
    return %c0_i32, %arg0 : i32, i32
  }
  func.func @transform_5(%arg0: i32) -> (i32, i32) {
    %c0_i32 = arith.constant 0 : i32
    %c0_i32_0 = arith.constant 0 : i32
    return %c0_i32, %arg0 : i32, i32
  }
  func.func @transform_6(%arg0: i32) -> (i32, i32) {
    %c0_i32 = arith.constant 0 : i32
    %c0_i32_0 = arith.constant 0 : i32
    return %c0_i32, %arg0 : i32, i32
  }
}

</mosaic_0001>

<llo_original>
// kernel: tpu_custom_call.1
$region0: #{tpu_custom_call.1}
  #allocation0 [shape = 'u32[]', space=smem, size = 0x4, offset = 0x4, fixed_abs, tag = 'smem constant byte address 0x4 - core index']
  #allocation1 [shape = 'u32[72,128]{1,0:T(1,128)}', space=vmem, size = 0x9000, scoped, tag = 'internal scratch']
  %s0 = inlined_call_operand.vmem [shape: f32[256,32], index: 0, kind: input, shape index: {}]
  %s1 = inlined_call_operand.vmem [shape: f32[8,32], index: 1, kind: input, shape index: {}]
  %s2 = inlined_call_operand.vmem [shape: f32[8,1], index: 2, kind: input, shape index: {}]
  %s3 = inlined_call_operand.hbm [shape: f32[8,256], index: 3, kind: output, shape index: {0}]
  %s4 = inlined_call_operand.hbm [shape: f32[2,256], index: 4, kind: output, shape index: {1}]
  %s5 = inlined_call_operand.hbm [shape: s32[2,256], index: 5, kind: output, shape index: {2}]
  %s6 = inlined_call_operand.hbm [shape: s8[16,256], index: 6, kind: output, shape index: {3}]
  %7 = xla_tuple %s3, %s4, %s5, %s6
  %s8 = sld [smem:[#allocation0]]
  $region69: #{tpu_custom_call.1} parent=0
    _
  %s10 = ssub.s32 1, %s8
  %s11 = scalar_select 0, %s10, %s8
  $region1: #{tpu_custom_call.1} parent=0
    #allocation2 [shape = 'u8[8192]{0}', space=vmem, size = 0x2000, scoped, tag = 'output window, operand 0']
    #allocation3 [shape = 's32[2]{0}', space=sflag, size = 0x8, scoped, tag = 'scoped memory for tpu_custom_call.1']
    #allocation4 [shape = 'u8[2048]{0}', space=vmem, size = 0x800, scoped, tag = 'output window, operand 1']
    #allocation5 [shape = 's32[2]{0}', space=sflag, size = 0x8, scoped, tag = 'scoped memory for tpu_custom_call.1']
    #allocation6 [shape = 'u8[2048]{0}', space=vmem, size = 0x800, scoped, tag = 'output window, operand 2']
    #allocation7 [shape = 'u8[4096]{0}', space=vmem, size = 0x1000, scoped, tag = 'output window, operand 3']
    #allocation8 [shape = 's32[2]{0}', space=sflag, size = 0x8, scoped, tag = 'scoped memory for tpu_custom_call.1']
    %12 = vsyncpa [#allocation3], 0
    %s13 = scalar_lea.sflag [#allocation3], 1
    %14 = vsyncpa %s13, 0
    %15 = vsyncpa [#allocation5], 0
    %s16 = scalar_lea.sflag [#allocation5], 1
    %17 = vsyncpa %s16, 0
    %18 = vsyncpa [#allocation8], 0
    %s19 = scalar_lea.sflag [#allocation8], 1
    %20 = vsyncpa %s19, 0
    loop: start=0, step=1, limit=4
    $region2: #{tpu_custom_call.1} parent=1 // loop_pre_header
      _
    $region3: #{tpu_custom_call.1} parent=1 // loop_header
      %s22 = sphi 0, %s26
      %p23 = scmp.ge.s32.totalorder %s22, 4
      %s32 = sphi 0, %s34
      %s35 = sphi 0, %s32
      %s36 = sphi 0, %s35
      %s52 = sphi 0, %s36
      %s56 = sphi 0, %s56
      %s58 = sphi 0, %s56
      %s59 = sphi 0, %s58
      %s73 = sphi 0, %s59
      %s77 = sphi 0, %s77
      %s79 = sphi 0, %s77
      %s80 = sphi 0, %s79
      %s94 = sphi 0, %s80
      %s100 = sphi 0, %s102
      %s103 = sphi 0, %s100
      %s104 = sphi 0, %s103
      %s120 = sphi 0, %s104
      %s126 = sphi 0, %s128
      %s129 = sphi 0, %s126
      %s130 = sphi 0, %s129
      %s146 = sphi 0, %s130
      %s152 = sphi 0, %s154
      %s155 = sphi 0, %s152
      %s156 = sphi 0, %s155
      %s172 = sphi 0, %s156
      %s178 = sphi 0, %s180
      %s181 = sphi 0, %s178
      %s182 = sphi 0, %s181
      %s198 = sphi 0, %s182
    $region4: #{tpu_custom_call.1} parent=1 // loop_header_branch
      %25 = sbr.rel (%p23) target = $region8
    $region5: #{tpu_custom_call.1} parent=1 // loop_body
      %s27 = ssub.s32 %s22, 1
      %s28 = ssub.s32 %s22, 2
      %s29 = sadd.s32 %s22, 1
      %s30 = ssub.s32 %s22, %s29
      %p31 = scmp.eq.s32.totalorder %s30, 0
      %s33 = sadd.s32 %s32, 1
      %s34 = scalar_select %p31, %s32, %s33
      %p37 = pneg %p31
      %p38 = scmp.eq.s32.totalorder %s22, 1
      %p39 = por %p37, %p38
      %p40 = scmp.ne.s32.totalorder %s32, %s35
      %p41 = scmp.eq.s32.totalorder %s22, 0
      %p42 = por %p40, %p41
      %p43 = scmp.ne.s32.totalorder %s32, %s35
      %p44 = scmp.eq.s32.totalorder %s27, 1
      %p45 = por %p43, %p44
      %p46 = scmp.ne.s32.totalorder %s35, %s36
      %p47 = scmp.eq.s32.totalorder %s27, 0
      %p48 = por %p46, %p47
      %p49 = scmp.ne.s32.totalorder %s35, %s36
      %p50 = scmp.eq.s32.totalorder %s28, 1
      %p51 = por %p49, %p50
      %p53 = scmp.ne.s32.totalorder %s36, %s52
      %p54 = scmp.eq.s32.totalorder %s28, 0
      %p55 = por %p53, %p54
      %s57 = sadd.s32 %s56, 1
      %p60 = scmp.eq.s32.totalorder %s22, 1
      %p61 = scmp.ne.s32.totalorder %s56, %s58
      %p62 = scmp.eq.s32.totalorder %s22, 0
      %p63 = por %p61, %p62
      %p64 = scmp.ne.s32.totalorder %s56, %s58
      %p65 = scmp.eq.s32.totalorder %s27, 1
      %p66 = por %p64, %p65
      %p67 = scmp.ne.s32.totalorder %s58, %s59
      %p68 = scmp.eq.s32.totalorder %s27, 0
      %p69 = por %p67, %p68
      %p70 = scmp.ne.s32.totalorder %s58, %s59
      %p71 = scmp.eq.s32.totalorder %s28, 1
      %p72 = por %p70, %p71
      %p74 = scmp.ne.s32.totalorder %s59, %s73
      %p75 = scmp.eq.s32.totalorder %s28, 0
      %p76 = por %p74, %p75
      %s78 = sadd.s32 %s77, 1
      %p81 = scmp.eq.s32.totalorder %s22, 1
      %p82 = scmp.ne.s32.totalorder %s77, %s79
      %p83 = scmp.eq.s32.totalorder %s22, 0
      %p84 = por %p82, %p83
      %p85 = scmp.ne.s32.totalorder %s77, %s79
      %p86 = scmp.eq.s32.totalorder %s27, 1
      %p87 = por %p85, %p86
      %p88 = scmp.ne.s32.totalorder %s79, %s80
      %p89 = scmp.eq.s32.totalorder %s27, 0
      %p90 = por %p88, %p89
      %p91 = scmp.ne.s32.totalorder %s79, %s80
      %p92 = scmp.eq.s32.totalorder %s28, 1
      %p93 = por %p91, %p92
      %p95 = scmp.ne.s32.totalorder %s80, %s94
      %p96 = scmp.eq.s32.totalorder %s28, 0
      %p97 = por %p95, %p96
      %s98 = ssub.s32 %s22, %s29
      %p99 = scmp.eq.s32.totalorder %s98, 0
      %s101 = sadd.s32 %s100, 1
      %s102 = scalar_select %p99, %s100, %s101
      %p105 = pneg %p99
      %p106 = scmp.eq.s32.totalorder %s22, 1
      %p107 = por %p105, %p106
      %p108 = scmp.ne.s32.totalorder %s100, %s103
      %p109 = scmp.eq.s32.totalorder %s22, 0
      %p110 = por %p108, %p109
      %p111 = scmp.ne.s32.totalorder %s100, %s103
      %p112 = scmp.eq.s32.totalorder %s27, 1
      %p113 = por %p111, %p112
      %p114 = scmp.ne.s32.totalorder %s103, %s104
      %p115 = scmp.eq.s32.totalorder %s27, 0
      %p116 = por %p114, %p115
      %p117 = scmp.ne.s32.totalorder %s103, %s104
      %p118 = scmp.eq.s32.totalorder %s28, 1
      %p119 = por %p117, %p118
      %p121 = scmp.ne.s32.totalorder %s104, %s120
      %p122 = scmp.eq.s32.totalorder %s28, 0
      %p123 = por %p121, %p122
      %s124 = ssub.s32 %s22, %s29
      %p125 = scmp.eq.s32.totalorder %s124, 0
      %s127 = sadd.s32 %s126, 1
      %s128 = scalar_select %p125, %s126, %s127
      %p131 = pneg %p125
      %p132 = scmp.eq.s32.totalorder %s22, 1
      %p133 = por %p131, %p132
      %p134 = scmp.ne.s32.totalorder %s126, %s129
      %p135 = scmp.eq.s32.totalorder %s22, 0
      %p136 = por %p134, %p135
      %p137 = scmp.ne.s32.totalorder %s126, %s129
      %p138 = scmp.eq.s32.totalorder %s27, 1
      %p139 = por %p137, %p138
      %p140 = scmp.ne.s32.totalorder %s129, %s130
      %p141 = scmp.eq.s32.totalorder %s27, 0
      %p142 = por %p140, %p141
      %p143 = scmp.ne.s32.totalorder %s129, %s130
      %p144 = scmp.eq.s32.totalorder %s28, 1
      %p145 = por %p143, %p144
      %p147 = scmp.ne.s32.totalorder %s130, %s146
      %p148 = scmp.eq.s32.totalorder %s28, 0
      %p149 = por %p147, %p148
      %s150 = ssub.s32 %s22, %s29
      %p151 = scmp.eq.s32.totalorder %s150, 0
      %s153 = sadd.s32 %s152, 1
      %s154 = scalar_select %p151, %s152, %s153
      %p157 = pneg %p151
      %p158 = scmp.eq.s32.totalorder %s22, 1
      %p159 = por %p157, %p158
      %p160 = scmp.ne.s32.totalorder %s152, %s155
      %p161 = scmp.eq.s32.totalorder %s22, 0
      %p162 = por %p160, %p161
      %p163 = scmp.ne.s32.totalorder %s152, %s155
      %p164 = scmp.eq.s32.totalorder %s27, 1
      %p165 = por %p163, %p164
      %p166 = scmp.ne.s32.totalorder %s155, %s156
      %p167 = scmp.eq.s32.totalorder %s27, 0
      %p168 = por %p166, %p167
      %p169 = scmp.ne.s32.totalorder %s155, %s156
      %p170 = scmp.eq.s32.totalorder %s28, 1
      %p171 = por %p169, %p170
      %p173 = scmp.ne.s32.totalorder %s156, %s172
      %p174 = scmp.eq.s32.totalorder %s28, 0
      %p175 = por %p173, %p174
      %s176 = ssub.s32 %s22, %s29
      %p177 = scmp.eq.s32.totalorder %s176, 0
      %s179 = sadd.s32 %s178, 1
      %s180 = scalar_select %p177, %s178, %s179
      %p183 = pneg %p177
      %p184 = scmp.eq.s32.totalorder %s22, 1
      %p185 = por %p183, %p184
      %p186 = scmp.ne.s32.totalorder %s178, %s181
      %p187 = scmp.eq.s32.totalorder %s22, 0
      %p188 = por %p186, %p187
      %p189 = scmp.ne.s32.totalorder %s178, %s181
      %p190 = scmp.eq.s32.totalorder %s27, 1
      %p191 = por %p189, %p190
      %p192 = scmp.ne.s32.totalorder %s181, %s182
      %p193 = scmp.eq.s32.totalorder %s27, 0
      %p194 = por %p192, %p193
      %p195 = scmp.ne.s32.totalorder %s181, %s182
      %p196 = scmp.eq.s32.totalorder %s28, 1
      %p197 = por %p195, %p196
      %p199 = scmp.ne.s32.totalorder %s182, %s198
      %p200 = scmp.eq.s32.totalorder %s28, 0
      %p201 = por %p199, %p200
      %p202 = scmp.le.s32.totalorder 1, %s22
      %p203 = scmp.lt.s32.totalorder %s22, 3
      %p204 = pnand %p202, %p203
      %p205 = pneg %p204
      // Predicated region
      $region9: #{tpu_custom_call.1} parent=5 // pred_check
        _
      $region10: #{tpu_custom_call.1} parent=5 // pred_check_branch
        %207 = sbr.rel (%p204) target = $region12
      $region11: #{tpu_custom_call.1} parent=5 // pred_region
        %s208 = ssub.s32 %s22, 1
        // Predicated region
        $region13: #{tpu_custom_call.1} parent=11 // pred_check
          %p209 = pneg %p69
        $region14: #{tpu_custom_call.1} parent=11 // pred_check_branch
          %211 = sbr.rel (%p209) target = $region16
        $region15: #{tpu_custom_call.1} parent=11 // pred_region
          _
        $region16: #{tpu_custom_call.1} parent=11 // pred_fallthru
          _
        // Predicated region
        $region17: #{tpu_custom_call.1} parent=11 // pred_check
          %p212 = pneg %p90
        $region18: #{tpu_custom_call.1} parent=11 // pred_check_branch
          %214 = sbr.rel (%p212) target = $region20
        $region19: #{tpu_custom_call.1} parent=11 // pred_region
          _
        $region20: #{tpu_custom_call.1} parent=11 // pred_fallthru
          _
      $region12: #{tpu_custom_call.1} parent=5 // pred_fallthru
        _
      %p215 = scmp.lt.s32.totalorder %s22, 2
      // Predicated region
      $region21: #{tpu_custom_call.1} parent=5 // pred_check
        %p216 = pneg %p215
      $region22: #{tpu_custom_call.1} parent=5 // pred_check_branch
        %218 = sbr.rel (%p216) target = $region24
      $region23: #{tpu_custom_call.1} parent=5 // pred_region
        // Predicated region
        $region25: #{tpu_custom_call.1} parent=23 // pred_check
          %p219 = pneg %p42
        $region26: #{tpu_custom_call.1} parent=23 // pred_check_branch
          %221 = sbr.rel (%p219) target = $region28
        $region27: #{tpu_custom_call.1} parent=23 // pred_region
          %s222 = smul.u32 16, %s22
          %p223 = scmp.lt.s32.totalorder %s222, 31
          %s224 = scalar_select %p223, %s222, 31
          %s225 = smul.addr %s224, 8
          %s226 = scalar_lea.vmem %s0, %s225
          %s227 = smul.u32 16, %s22
        $region28: #{tpu_custom_call.1} parent=23 // pred_fallthru
          _
      $region24: #{tpu_custom_call.1} parent=5 // pred_fallthru
        _
      %p228 = scmp.le.s32.totalorder 1, %s22
      %p229 = scmp.lt.s32.totalorder %s22, 3
      %p230 = pnand %p228, %p229
      %p231 = pneg %p230
      // Predicated region
      $region29: #{tpu_custom_call.1} parent=5 // pred_check
        _
      $region30: #{tpu_custom_call.1} parent=5 // pred_check_branch
        %233 = sbr.rel (%p230) target = $region32
      $region31: #{tpu_custom_call.1} parent=5 // pred_region
        %s234 = ssub.s32 %s22, 1
        %s235 = smul.u32 16, %s27
        %p236 = scmp.lt.s32.totalorder %s235, 31
        %s237 = scalar_select %p236, %s235, 31
        %s238 = smul.addr %s237, 8
        %s239 = scalar_lea.vmem %s0, %s238
        %p240 = pneg %p48
        %p241 = pneg %p45
        %p242 = pneg %p69
        %p243 = pneg %p66
        %p244 = pneg %p90
        %p245 = pneg %p87
        %p246 = pneg %p116
        %p247 = pneg %p113
        %s248 = sand.u32 %s103, 1
        %s249 = scalar_lea.sflag [#allocation3], %s248
        %s250 = sand.u32 %s103, 1
        %s251 = smul.addr %s250, 8
        %s252 = scalar_lea.vmem [#allocation2], %s251
        %p253 = pneg %p142
        %p254 = pneg %p139
        %s255 = sand.u32 %s27, 1
        %s256 = scalar_lea.sflag [#allocation5], %s255
        %s257 = sand.u32 %s129, 1
        %s258 = smul.addr %s257, 2
        %s259 = scalar_lea.vmem [#allocation4], %s258
        %p260 = pneg %p168
        %p261 = pneg %p165
        %s262 = sand.u32 %s27, 1
        %s263 = scalar_lea.sflag [#allocation5], %s262
        %s264 = sand.u32 %s155, 1
        %s265 = smul.addr %s264, 2
        %s266 = scalar_lea.vmem [#allocation6], %s265
        %p267 = pneg %p194
        %p268 = pneg %p191
        %s269 = sand.u32 %s181, 1
        %s270 = scalar_lea.sflag [#allocation8], %s269
        %s271 = sand.u32 %s181, 1
        %s272 = smul.addr %s271, 4
        %s273 = scalar_lea.vmem [#allocation7], %s272
        %s274 = smul.u32 16, %s27
        %p275 = scmp.lt.s32.totalorder %s274, 31
        %s276 = scalar_select %p275, %s274, 31
        %s277 = smul.addr %s276, 8
        %s278 = scalar_lea.vmem %s0, %s277
        %s279 = smul.u32 16, %s27
        %v282 = vld [vmem:[%s278] sm:$0xff]
        %v283 = vld [vmem:[%s278 + $0x8] sm:$0xff]
        %v284 = vld [vmem:[%s278 + $0x10] sm:$0xff]
        %v285 = vld [vmem:[%s278 + $0x18] sm:$0xff]
        %v286 = vld [vmem:[%s278 + $0x20] sm:$0xff]
        %v287 = vld [vmem:[%s278 + $0x28] sm:$0xff]
        %v288 = vld [vmem:[%s278 + $0x30] sm:$0xff]
        %v289 = vld [vmem:[%s278 + $0x38] sm:$0xff]
        %v290 = vld [vmem:[%s278 + $0x40] sm:$0xff]
        %v291 = vld [vmem:[%s278 + $0x48] sm:$0xff]
        %v292 = vld [vmem:[%s278 + $0x50] sm:$0xff]
        %v293 = vld [vmem:[%s278 + $0x58] sm:$0xff]
        %v294 = vld [vmem:[%s278 + $0x60] sm:$0xff]
        %v295 = vld [vmem:[%s278 + $0x68] sm:$0xff]
        %v296 = vld [vmem:[%s278 + $0x70] sm:$0xff]
        %v297 = vld [vmem:[%s278 + $0x78] sm:$0xff]
        %v298 = vld [vmem:[%s1] sm:$0xff]
        %v299 = vld [vmem:[%s2] sm:$0xff]
        %301 = vset.pattern.permute.xlu0 0
        %302 = vperm.xlu0 %301, %v299
        %v303 = vpop.permute.xlu0 %302
        %vm305 = vcmask 261120
        %v307 = vsel %vm305, %v298, 0
        %v310 = vsel %vm305, %v282, 0
        %v313 = vsel %vm305, %v283, 0
        %v316 = vsel %vm305, %v284, 0
        %v319 = vsel %vm305, %v285, 0
        %v322 = vsel %vm305, %v286, 0
        %v325 = vsel %vm305, %v287, 0
        %v328 = vsel %vm305, %v288, 0
        %v331 = vsel %vm305, %v289, 0
        %v334 = vsel %vm305, %v290, 0
        %v337 = vsel %vm305, %v291, 0
        %v340 = vsel %vm305, %v292, 0
        %v343 = vsel %vm305, %v293, 0
        %v346 = vsel %vm305, %v294, 0
        %v349 = vsel %vm305, %v295, 0
        %v352 = vsel %vm305, %v296, 0
        %v355 = vsel %vm305, %v297, 0
        %357 = vmatpush.xpose.msra.mxu0 %v355
        %358 = vmatpush.xpose.msra.mxu0 %v352
        %359 = vmatpush.xpose.msra.mxu0 %v349
        %360 = vmatpush.xpose.msra.mxu0 %v346
        %361 = vmatpush.xpose.msra.mxu0 %v343
        %362 = vmatpush.xpose.msra.mxu0 %v340
        %363 = vmatpush.xpose.msra.mxu0 %v337
        %364 = vmatpush.xpose.msra.mxu0 %v334
        %365 = vmatpush.xpose.msra.mxu0 %v331
        %366 = vmatpush.xpose.msra.mxu0 %v328
        %367 = vmatpush.xpose.msra.mxu0 %v325
        %368 = vmatpush.xpose.msra.mxu0 %v322
        %369 = vmatpush.xpose.msra.mxu0 %v319
        %370 = vmatpush.xpose.msra.mxu0 %v316
        %371 = vmatpush.xpose.msra.mxu0 %v313
        %372 = vmatpush.xpose.msra.mxu0 %v310
        %373 = vmatmul.f32.gmra.mxu0 %v307
        %v374 = vpop.f32.mrf.mxu0
        %v375 = vadd.f32 %v303, %v374
        %376 = vdwg.mxu0
        %377 = vst [vmem:[%s252] sm:$0xff] %v375
        %v378 = vlaneseq
        %v379 = vshrl.u32 %v378, 7
        %v380 = vrot.slane %v375, 4
        %v381 = vmax.f32 %v375, %v380
        %v382 = vrot.slane %v381, 2
        %v383 = vmax.f32 %v381, %v382
        %v384 = vrot.slane %v383, 1
        %v385 = vmax.f32 %v383, %v384
        %vm386 = vcmp.eq.f32.partialorder %v375, %v385
        %v387 = vsel %vm386, %v379, 8
        %v388 = vrot.slane %v387, 4
        %vm389 = vcmp.lt.s32.totalorder %v387, %v388
        %v390 = vsel %vm389, %v387, %v388
        %v391 = vrot.slane %v390, 2
        %vm392 = vcmp.lt.s32.totalorder %v390, %v391
        %v393 = vsel %vm392, %v390, %v391
        %v394 = vrot.slane %v393, 1
        %vm395 = vcmp.lt.s32.totalorder %v393, %v394
        %v396 = vsel %vm395, %v393, %v394
        %vm397 = vcmp.eq.s32.totalorder %v379, %v396
        %v398 = vsel %vm397, -inf, %v375
        %v399 = vrot.slane %v398, 4
        %v400 = vmax.f32 %v398, %v399
        %v401 = vrot.slane %v400, 2
        %v402 = vmax.f32 %v400, %v401
        %v403 = vrot.slane %v402, 1
        %v404 = vmax.f32 %v402, %v403
        %vm405 = vcmp.eq.f32.partialorder %v398, %v404
        %v406 = vsel %vm405, %v379, 8
        %v407 = vrot.slane %v406, 4
        %vm408 = vcmp.lt.s32.totalorder %v406, %v407
        %v409 = vsel %vm408, %v406, %v407
        %v410 = vrot.slane %v409, 2
        %vm411 = vcmp.lt.s32.totalorder %v409, %v410
        %v412 = vsel %vm411, %v409, %v410
        %v413 = vrot.slane %v412, 1
        %vm414 = vcmp.lt.s32.totalorder %v412, %v413
        %v415 = vsel %vm414, %v412, %v413
        %v416 = vsub.f32 %v385, %v385
        %v417 = vmul.f32 %v416, 1.442695
        %v418 = vpow.pop %v417
        %v419 = vsub.f32 %v404, %v385
        %v420 = vmul.f32 %v419, 1.442695
        %v421 = vpow.pop %v420
        %v422 = vadd.f32 %v418, %v421
        %v423 = vrcp.pop %v422
        %v424 = vmul.f32 %v422, %v423
        %v425 = vsub.f32 1.0, %v424
        %v426 = vmul.f32 %v423, %v425
        %v427 = vadd.f32 %v423, %v426
        %vm428 = vweird.f32 %v422
        %vm429 = vweird.f32 %v423
        %vm430 = vmor %vm428, %vm429
        %v431 = vsel %vm430, %v423, %v427
        %v432 = vand.u32 2147483647, %v422
        %vm433 = vcmp.eq.f32.partialorder %v432, 8.507059e+37
        %v434 = vand.u32 %v422, 2147483648
        %v435 = vor.u32 1.1754944e-38, %v434
        %v436 = vsel %vm433, %v435, %v431
        %v437 = vmul.f32 1.0, %v436
        %v438 = vmul.f32 %v418, %v437
        %v439 = vmul.f32 %v421, %v437
        %vm440 = vcmask 1040384
        %v441 = vsel %vm440, %v438, %v439
        %442 = vst [vmem:[%s259] sm:$0x3] %v441
        %v443 = vsel %vm440, %v396, %v415
        %444 = vst [vmem:[%s266] sm:$0x3] %v443
        %v445 = vadd.s32 %v379, 8
        %v446 = vmul.u32 %v443, 2
        %v447 = vadd.s32 %v446, %v379
        %v448 = vperm.slane %v447, 0
        %vm449 = vcmp.eq.s32.totalorder %v379, %v448
        %vm450 = vcmp.eq.s32.totalorder %v445, %v448
        %v451 = vperm.slane %v447, 1
        %vm452 = vcmp.eq.s32.totalorder %v379, %v451
        %vm453 = vcmp.eq.s32.totalorder %v445, %v451
        %vm454 = vmor %vm449, %vm452
        %vm455 = vmor %vm450, %vm453
        %vm456 = vmpackc.low %vm455, %vm454
        %v457 = vsel %vm456, 16711935, 0
        %v458 = vsel %vm456, 16711935, 0
        %v459 = vpack.c.b8 %v458, %v457
        %vm460 = vnez %v459
        %v461 = vsel %vm460, 16843009, 0
        %v462 = vunpack.c.0.s8 %v461
        %v463 = vunpack.c.1.s8 %v461
        %v464 = vpack.c.b16 %v462, %v462
        %v465 = vpack.c.b8 %v464, %v464
        %v466 = vpack.c.b16 %v463, %v463
        %v467 = vpack.c.b8 %v466, %v466
        %468 = vst [vmem:[%s273] sm:$0x3] %v465
        %469 = vst [vmem:[%s273 + $0x2] sm:$0x3] %v467
        %s470 = sand.u32 %s103, 1
        %s471 = scalar_lea.sflag [#allocation3], %s470
        %s472 = sand.u32 %s103, 1
        %s473 = smul.addr %s472, 8
        %s474 = scalar_lea.vmem [#allocation2], %s473
        %s475 = sand.u32 %s27, 1
        %s476 = scalar_lea.sflag [#allocation5], %s475
        %s477 = sand.u32 %s129, 1
        %s478 = smul.addr %s477, 2
        %s479 = scalar_lea.vmem [#allocation4], %s478
        %s480 = sand.u32 %s27, 1
        %s481 = scalar_lea.sflag [#allocation5], %s480
        %s482 = sand.u32 %s155, 1
        %s483 = smul.addr %s482, 2
        %s484 = scalar_lea.vmem [#allocation6], %s483
        %s485 = sand.u32 %s181, 1
        %s486 = scalar_lea.sflag [#allocation8], %s485
        %s487 = sand.u32 %s181, 1
        %s488 = smul.addr %s487, 4
        %s489 = scalar_lea.vmem [#allocation7], %s488
        // Predicated region
        $region33: #{tpu_custom_call.1} parent=31 // pred_check
          %p490 = pneg %p113
        $region34: #{tpu_custom_call.1} parent=31 // pred_check_branch
          %492 = sbr.rel (%p490) target = $region36
        $region35: #{tpu_custom_call.1} parent=31 // pred_region
          %494 = vsyncadd %s471, 0
          %s495 = smul.addr %s27, 8
          %s496 = scalar_lea.hbm %s3, %s495
          %s498 = sshll.u32 %s474, 4
          %s499 = int_to_ptr.vmem [resolvable:$true] %s498
          %s500 = sshll.u32 %s496, 4
          %s501 = int_to_ptr.hbm [resolvable:$true] %s500
          %503 = dma.vmem_to_hbm [thread:$0]  %s499, 128, %s501, %s471
        $region36: #{tpu_custom_call.1} parent=31 // pred_fallthru
          _
        // Predicated region
        $region37: #{tpu_custom_call.1} parent=31 // pred_check
          %p504 = pneg %p139
        $region38: #{tpu_custom_call.1} parent=31 // pred_check_branch
          %506 = sbr.rel (%p504) target = $region40
        $region39: #{tpu_custom_call.1} parent=31 // pred_region
          %508 = vsyncadd %s476, 0
          %s509 = smul.addr %s27, 2
          %s510 = scalar_lea.hbm %s4, %s509
          %s512 = sshll.u32 %s479, 4
          %s513 = int_to_ptr.vmem [resolvable:$true] %s512
          %s514 = sshll.u32 %s510, 4
          %s515 = int_to_ptr.hbm [resolvable:$true] %s514
          %517 = dma.vmem_to_hbm [thread:$0]  %s513, 32, %s515, %s476
        $region40: #{tpu_custom_call.1} parent=31 // pred_fallthru
          _
        // Predicated region
        $region41: #{tpu_custom_call.1} parent=31 // pred_check
          %p518 = pneg %p165
        $region42: #{tpu_custom_call.1} parent=31 // pred_check_branch
          %520 = sbr.rel (%p518) target = $region44
        $region43: #{tpu_custom_call.1} parent=31 // pred_region
          %522 = vsyncadd %s481, 0
          %s523 = smul.addr %s27, 2
          %s524 = scalar_lea.hbm %s5, %s523
          %s526 = sshll.u32 %s484, 4
          %s527 = int_to_ptr.vmem [resolvable:$true] %s526
          %s528 = sshll.u32 %s524, 4
          %s529 = int_to_ptr.hbm [resolvable:$true] %s528
          %531 = dma.vmem_to_hbm [thread:$0]  %s527, 32, %s529, %s481
        $region44: #{tpu_custom_call.1} parent=31 // pred_fallthru
          _
        // Predicated region
        $region45: #{tpu_custom_call.1} parent=31 // pred_check
          %p532 = pneg %p191
        $region46: #{tpu_custom_call.1} parent=31 // pred_check_branch
          %534 = sbr.rel (%p532) target = $region48
        $region47: #{tpu_custom_call.1} parent=31 // pred_region
          %536 = vsyncadd %s486, 0
          %s537 = smul.addr %s27, 2
          %s538 = scalar_lea.hbm %s6, %s537
          %s539 = sshll.u32 %s489, 4
          %s540 = int_to_ptr.vmem [resolvable:$true] %s539
          %s541 = sshll.u32 %s538, 4
          %s542 = int_to_ptr.hbm [resolvable:$true] %s541
          %547 = dma.vmem_to_hbm [thread:$0]  %s540, 64, %s542, %s486, 32, 64, 2
        $region48: #{tpu_custom_call.1} parent=31 // pred_fallthru
          _
      $region32: #{tpu_custom_call.1} parent=5 // pred_fallthru
        _
      %p548 = scmp.le.s32.totalorder 2, %s22
      // Predicated region
      $region49: #{tpu_custom_call.1} parent=5 // pred_check
        %p549 = pneg %p548
      $region50: #{tpu_custom_call.1} parent=5 // pred_check_branch
        %551 = sbr.rel (%p549) target = $region52
      $region51: #{tpu_custom_call.1} parent=5 // pred_region
        %s552 = ssub.s32 %s22, 2
        // Predicated region
        $region53: #{tpu_custom_call.1} parent=51 // pred_check
          %p553 = pneg %p119
        $region54: #{tpu_custom_call.1} parent=51 // pred_check_branch
          %555 = sbr.rel (%p553) target = $region56
        $region55: #{tpu_custom_call.1} parent=51 // pred_region
          %s556 = sand.u32 %s104, 1
          %s557 = scalar_lea.sflag [#allocation3], %s556
          %s558 = sand.u32 %s104, 1
          %s559 = smul.addr %s558, 8
          %s560 = scalar_lea.vmem [#allocation2], %s559
          %562 = dma.done %s557, 128
        $region56: #{tpu_custom_call.1} parent=51 // pred_fallthru
          _
        // Predicated region
        $region57: #{tpu_custom_call.1} parent=51 // pred_check
          %p563 = pneg %p145
        $region58: #{tpu_custom_call.1} parent=51 // pred_check_branch
          %565 = sbr.rel (%p563) target = $region60
        $region59: #{tpu_custom_call.1} parent=51 // pred_region
          %s566 = sand.u32 %s28, 1
          %s567 = scalar_lea.sflag [#allocation5], %s566
          %s568 = sand.u32 %s130, 1
          %s569 = smul.addr %s568, 2
          %s570 = scalar_lea.vmem [#allocation4], %s569
          %572 = dma.done %s567, 32
        $region60: #{tpu_custom_call.1} parent=51 // pred_fallthru
          _
        // Predicated region
        $region61: #{tpu_custom_call.1} parent=51 // pred_check
          %p573 = pneg %p171
        $region62: #{tpu_custom_call.1} parent=51 // pred_check_branch
          %575 = sbr.rel (%p573) target = $region64
        $region63: #{tpu_custom_call.1} parent=51 // pred_region
          %s576 = sand.u32 %s28, 1
          %s577 = scalar_lea.sflag [#allocation5], %s576
          %s578 = sand.u32 %s156, 1
          %s579 = smul.addr %s578, 2
          %s580 = scalar_lea.vmem [#allocation6], %s579
          %582 = dma.done %s577, 32
        $region64: #{tpu_custom_call.1} parent=51 // pred_fallthru
          _
        // Predicated region
        $region65: #{tpu_custom_call.1} parent=51 // pred_check
          %p583 = pneg %p197
        $region66: #{tpu_custom_call.1} parent=51 // pred_check_branch
          %585 = sbr.rel (%p583) target = $region68
        $region67: #{tpu_custom_call.1} parent=51 // pred_region
          %s586 = sand.u32 %s182, 1
          %s587 = scalar_lea.sflag [#allocation8], %s586
          %s588 = sand.u32 %s182, 1
          %s589 = smul.addr %s588, 4
          %s590 = scalar_lea.vmem [#allocation7], %s589
          %592 = dma.done %s587, 64
        $region68: #{tpu_custom_call.1} parent=51 // pred_fallthru
          _
      $region52: #{tpu_custom_call.1} parent=5 // pred_fallthru
        _
    $region6: #{tpu_custom_call.1} parent=1 // loop_footer
      %s26 = sadd.s32 1, %s22
    $region7: #{tpu_custom_call.1} parent=1 // loop_footer_branch
      %21 = sbr.rel target = $region3
    $region8: #{tpu_custom_call.1} parent=1 // loop_exit
      _
    %593 = vsyncpa [#allocation3], 1
    %s594 = scalar_lea.sflag [#allocation3], 1
    %595 = vsyncpa %s594, 1
    %596 = vsyncpa [#allocation5], 1
    %s597 = scalar_lea.sflag [#allocation5], 1
    %598 = vsyncpa %s597, 1
    %599 = vsyncpa [#allocation8], 1
    %s600 = scalar_lea.sflag [#allocation8], 1
    %601 = vsyncpa %s600, 1

// kernel: tpu_custom_call.1
$region0: #{tpu_custom_call.1}
  #allocation0 [shape = 'u32[]', space=smem, size = 0x4, offset = 0x4, fixed_abs, tag = 'smem constant byte address 0x4 - core index']
  #allocation1 [shape = 'u32[72,128]{1,0:T(1,128)}', space=vmem, size = 0x9000, scoped, tag = 'internal scratch']
  %s0 = inlined_call_operand.vmem [shape: f32[256,32], index: 0, kind: input, shape index: {}]
  %s1 = inlined_call_operand.vmem [shape: f32[8,32], index: 1, kind: input, shape index: {}]
  %s2 = inlined_call_operand.vmem [shape: f32[8,1], index: 2, kind: input, shape index: {}]
  %s3 = inlined_call_operand.hbm [shape: f32[8,256], index: 3, kind: output, shape index: {0}]
  %s4 = inlined_call_operand.hbm [shape: f32[2,256], index: 4, kind: output, shape index: {1}]
  %s5 = inlined_call_operand.hbm [shape: s32[2,256], index: 5, kind: output, shape index: {2}]
  %s6 = inlined_call_operand.hbm [shape: s8[16,256], index: 6, kind: output, shape index: {3}]
  %7 = xla_tuple %s3, %s4, %s5, %s6
  %s8 = sld [smem:[#allocation0]]
  $region69: #{tpu_custom_call.1} parent=0
    _
  %s10 = ssub.s32 1, %s8
  %s11 = scalar_select 0, %s10, %s8
  $region1: #{tpu_custom_call.1} parent=0
    #allocation2 [shape = 'u8[8192]{0}', space=vmem, size = 0x2000, scoped, tag = 'output window, operand 0']
    #allocation3 [shape = 's32[2]{0}', space=sflag, size = 0x8, scoped, tag = 'scoped memory for tpu_custom_call.1']
    #allocation4 [shape = 'u8[2048]{0}', space=vmem, size = 0x800, scoped, tag = 'output window, operand 1']
    #allocation5 [shape = 's32[2]{0}', space=sflag, size = 0x8, scoped, tag = 'scoped memory for tpu_custom_call.1']
    #allocation6 [shape = 'u8[2048]{0}', space=vmem, size = 0x800, scoped, tag = 'output window, operand 2']
    #allocation7 [shape = 'u8[4096]{0}', space=vmem, size = 0x1000, scoped, tag = 'output window, operand 3']
    #allocation8 [shape = 's32[2]{0}', space=sflag, size = 0x8, scoped, tag = 'scoped memory for tpu_custom_call.1']
    %12 = vsyncpa [#allocation3], 0
    %s13 = scalar_lea.sflag [#allocation3], 1
    %14 = vsyncpa %s13, 0
    %15 = vsyncpa [#allocation5], 0
    %s16 = scalar_lea.sflag [#allocation5], 1
    %17 = vsyncpa %s16, 0
    %18 = vsyncpa [#allocation8], 0
    %s19 = scalar_lea.sflag [#allocation8], 1
    %20 = vsyncpa %s19, 0
    loop: start=0, step=1, limit=4
    $region2: #{tpu_custom_call.1} parent=1 // loop_pre_header
      _
    $region3: #{tpu_custom_call.1} parent=1 // loop_header
      %s22 = sphi 0, %s26
      %p23 = scmp.ge.s32.totalorder %s22, 4
      %s32 = sphi 0, %s34
      %s35 = sphi 0, %s32
      %s36 = sphi 0, %s35
      %s52 = sphi 0, %s36
      %s56 = sphi 0, %s56
      %s58 = sphi 0, %s56
      %s59 = sphi 0, %s58
      %s73 = sphi 0, %s59
      %s77 = sphi 0, %s77
      %s79 = sphi 0, %s77
      %s80 = sphi 0, %s79
      %s94 = sphi 0, %s80
      %s100 = sphi 0, %s102
      %s103 = sphi 0, %s100
      %s104 = sphi 0, %s103
      %s120 = sphi 0, %s104
      %s126 = sphi 0, %s128
      %s129 = sphi 0, %s126
      %s130 = sphi 0, %s129
      %s146 = sphi 0, %s130
      %s152 = sphi 0, %s154
      %s155 = sphi 0, %s152
      %s156 = sphi 0, %s155
      %s172 = sphi 0, %s156
      %s178 = sphi 0, %s180
      %s181 = sphi 0, %s178
      %s182 = sphi 0, %s181
      %s198 = sphi 0, %s182
    $region4: #{tpu_custom_call.1} parent=1 // loop_header_branch
      %25 = sbr.rel (%p23) target = $region8
    $region5: #{tpu_custom_call.1} parent=1 // loop_body
      %s27 = ssub.s32 %s22, 1
      %s28 = ssub.s32 %s22, 2
      %s29 = sadd.s32 %s22, 1
      %s30 = ssub.s32 %s22, %s29
      %p31 = scmp.eq.s32.totalorder %s30, 0
      %s33 = sadd.s32 %s32, 1
      %s34 = scalar_select %p31, %s32, %s33
      %p37 = pneg %p31
      %p38 = scmp.eq.s32.totalorder %s22, 1
      %p39 = por %p37, %p38
      %p40 = scmp.ne.s32.totalorder %s32, %s35
      %p41 = scmp.eq.s32.totalorder %s22, 0
      %p42 = por %p40, %p41
      %p43 = scmp.ne.s32.totalorder %s32, %s35
      %p44 = scmp.eq.s32.totalorder %s27, 1
      %p45 = por %p43, %p44
      %p46 = scmp.ne.s32.totalorder %s35, %s36
      %p47 = scmp.eq.s32.totalorder %s27, 0
      %p48 = por %p46, %p47
      %p49 = scmp.ne.s32.totalorder %s35, %s36
      %p50 = scmp.eq.s32.totalorder %s28, 1
      %p51 = por %p49, %p50
      %p53 = scmp.ne.s32.totalorder %s36, %s52
      %p54 = scmp.eq.s32.totalorder %s28, 0
      %p55 = por %p53, %p54
      %s57 = sadd.s32 %s56, 1
      %p60 = scmp.eq.s32.totalorder %s22, 1
      %p61 = scmp.ne.s32.totalorder %s56, %s58
      %p62 = scmp.eq.s32.totalorder %s22, 0
      %p63 = por %p61, %p62
      %p64 = scmp.ne.s32.totalorder %s56, %s58
      %p65 = scmp.eq.s32.totalorder %s27, 1
      %p66 = por %p64, %p65
      %p67 = scmp.ne.s32.totalorder %s58, %s59
      %p68 = scmp.eq.s32.totalorder %s27, 0
      %p69 = por %p67, %p68
      %p70 = scmp.ne.s32.totalorder %s58, %s59
      %p71 = scmp.eq.s32.totalorder %s28, 1
      %p72 = por %p70, %p71
      %p74 = scmp.ne.s32.totalorder %s59, %s73
      %p75 = scmp.eq.s32.totalorder %s28, 0
      %p76 = por %p74, %p75
      %s78 = sadd.s32 %s77, 1
      %p81 = scmp.eq.s32.totalorder %s22, 1
      %p82 = scmp.ne.s32.totalorder %s77, %s79
      %p83 = scmp.eq.s32.totalorder %s22, 0
      %p84 = por %p82, %p83
      %p85 = scmp.ne.s32.totalorder %s77, %s79
      %p86 = scmp.eq.s32.totalorder %s27, 1
      %p87 = por %p85, %p86
      %p88 = scmp.ne.s32.totalorder %s79, %s80
      %p89 = scmp.eq.s32.totalorder %s27, 0
      %p90 = por %p88, %p89
      %p91 = scmp.ne.s32.totalorder %s79, %s80
      %p92 = scmp.eq.s32.totalorder %s28, 1
      %p93 = por %p91, %p92
      %p95 = scmp.ne.s32.totalorder %s80, %s94
      %p96 = scmp.eq.s32.totalorder %s28, 0
      %p97 = por %p95, %p96
      %s98 = ssub.s32 %s22, %s29
      %p99 = scmp.eq.s32.totalorder %s98, 0
      %s101 = sadd.s32 %s100, 1
      %s102 = scalar_select %p99, %s100, %s101
      %p105 = pneg %p99
      %p106 = scmp.eq.s32.totalorder %s22, 1
      %p107 = por %p105, %p106
      %p108 = scmp.ne.s32.totalorder %s100, %s103
      %p109 = scmp.eq.s32.totalorder %s22, 0
      %p110 = por %p108, %p109
      %p111 = scmp.ne.s32.totalorder %s100, %s103
      %p112 = scmp.eq.s32.totalorder %s27, 1
      %p113 = por %p111, %p112
      %p114 = scmp.ne.s32.totalorder %s103, %s104
      %p115 = scmp.eq.s32.totalorder %s27, 0
      %p116 = por %p114, %p115
      %p117 = scmp.ne.s32.totalorder %s103, %s104
      %p118 = scmp.eq.s32.totalorder %s28, 1
      %p119 = por %p117, %p118
      %p121 = scmp.ne.s32.totalorder %s104, %s120
      %p122 = scmp.eq.s32.totalorder %s28, 0
      %p123 = por %p121, %p122
      %s124 = ssub.s32 %s22, %s29
      %p125 = scmp.eq.s32.totalorder %s124, 0
      %s127 = sadd.s32 %s126, 1
      %s128 = scalar_select %p125, %s126, %s127
      %p131 = pneg %p125
      %p132 = scmp.eq.s32.totalorder %s22, 1
      %p133 = por %p131, %p132
      %p134 = scmp.ne.s32.totalorder %s126, %s129
      %p135 = scmp.eq.s32.totalorder %s22, 0
      %p136 = por %p134, %p135
      %p137 = scmp.ne.s32.totalorder %s126, %s129
      %p138 = scmp.eq.s32.totalorder %s27, 1
      %p139 = por %p137, %p138
      %p140 = scmp.ne.s32.totalorder %s129, %s130
      %p141 = scmp.eq.s32.totalorder %s27, 0
      %p142 = por %p140, %p141
      %p143 = scmp.ne.s32.totalorder %s129, %s130
      %p144 = scmp.eq.s32.totalorder %s28, 1
      %p145 = por %p143, %p144
      %p147 = scmp.ne.s32.totalorder %s130, %s146
      %p148 = scmp.eq.s32.totalorder %s28, 0
      %p149 = por %p147, %p148
      %s150 = ssub.s32 %s22, %s29
      %p151 = scmp.eq.s32.totalorder %s150, 0
      %s153 = sadd.s32 %s152, 1
      %s154 = scalar_select %p151, %s152, %s153
      %p157 = pneg %p151
      %p158 = scmp.eq.s32.totalorder %s22, 1
      %p159 = por %p157, %p158
      %p160 = scmp.ne.s32.totalorder %s152, %s155
      %p161 = scmp.eq.s32.totalorder %s22, 0
      %p162 = por %p160, %p161
      %p163 = scmp.ne.s32.totalorder %s152, %s155
      %p164 = scmp.eq.s32.totalorder %s27, 1
      %p165 = por %p163, %p164
      %p166 = scmp.ne.s32.totalorder %s155, %s156
      %p167 = scmp.eq.s32.totalorder %s27, 0
      %p168 = por %p166, %p167
      %p169 = scmp.ne.s32.totalorder %s155, %s156
      %p170 = scmp.eq.s32.totalorder %s28, 1
      %p171 = por %p169, %p170
      %p173 = scmp.ne.s32.totalorder %s156, %s172
      %p174 = scmp.eq.s32.totalorder %s28, 0
      %p175 = por %p173, %p174
      %s176 = ssub.s32 %s22, %s29
      %p177 = scmp.eq.s32.totalorder %s176, 0
      %s179 = sadd.s32 %s178, 1
      %s180 = scalar_select %p177, %s178, %s179
      %p183 = pneg %p177
      %p184 = scmp.eq.s32.totalorder %s22, 1
      %p185 = por %p183, %p184
      %p186 = scmp.ne.s32.totalorder %s178, %s181
      %p187 = scmp.eq.s32.totalorder %s22, 0
      %p188 = por %p186, %p187
      %p189 = scmp.ne.s32.totalorder %s178, %s181
      %p190 = scmp.eq.s32.totalorder %s27, 1
      %p191 = por %p189, %p190
      %p192 = scmp.ne.s32.totalorder %s181, %s182
      %p193 = scmp.eq.s32.totalorder %s27, 0
      %p194 = por %p192, %p193
      %p195 = scmp.ne.s32.totalorder %s181, %s182
      %p196 = scmp.eq.s32.totalorder %s28, 1
      %p197 = por %p195, %p196
      %p199 = scmp.ne.s32.totalorder %s182, %s198
      %p200 = scmp.eq.s32.totalorder %s28, 0
      %p201 = por %p199, %p200
      %p202 = scmp.le.s32.totalorder 1, %s22
      %p203 = scmp.lt.s32.totalorder %s22, 3
      %p204 = pnand %p202, %p203
      %p205 = pneg %p204
      // Predicated region
      $region9: #{tpu_custom_call.1} parent=5 // pred_check
        _
      $region10: #{tpu_custom_call.1} parent=5 // pred_check_branch
        %207 = sbr.rel (%p204) target = $region12
      $region11: #{tpu_custom_call.1} parent=5 // pred_region
        %s208 = ssub.s32 %s22, 1
        // Predicated region
        $region13: #{tpu_custom_call.1} parent=11 // pred_check
          %p209 = pneg %p69
        $region14: #{tpu_custom_call.1} parent=11 // pred_check_branch
          %211 = sbr.rel (%p209) target = $region16
        $region15: #{tpu_custom_call.1} parent=11 // pred_region
          _
        $region16: #{tpu_custom_call.1} parent=11 // pred_fallthru
          _
        // Predicated region
        $region17: #{tpu_custom_call.1} parent=11 // pred_check
          %p212 = pneg %p90
        $region18: #{tpu_custom_call.1} parent=11 // pred_check_branch
          %214 = sbr.rel (%p212) target = $region20
        $region19: #{tpu_custom_call.1} parent=11 // pred_region
          _
        $region20: #{tpu_custom_call.1} parent=11 // pred_fallthru
          _
      $region12: #{tpu_custom_call.1} parent=5 // pred_fallthru
        _
      %p215 = scmp.lt.s32.totalorder %s22, 2
      // Predicated region
      $region21: #{tpu_custom_call.1} parent=5 // pred_check
        %p216 = pneg %p215
      $region22: #{tpu_custom_call.1} parent=5 // pred_check_branch
        %218 = sbr.rel (%p216) target = $region24
      $region23: #{tpu_custom_call.1} parent=5 // pred_region
        // Predicated region
        $region25: #{tpu_custom_call.1} parent=23 // pred_check
          %p219 = pneg %p42
        $region26: #{tpu_custom_call.1} parent=23 // pred_check_branch
          %221 = sbr.rel (%p219) target = $region28
        $region27: #{tpu_custom_call.1} parent=23 // pred_region
          %s222 = smul.u32 16, %s22
          %p223 = scmp.lt.s32.totalorder %s222, 31
          %s224 = scalar_select %p223, %s222, 31
          %s225 = smul.addr %s224, 8
          %s226 = scalar_lea.vmem %s0, %s225
          %s227 = smul.u32 16, %s22
        $region28: #{tpu_custom_call.1} parent=23 // pred_fallthru
          _
      $region24: #{tpu_custom_call.1} parent=5 // pred_fallthru
        _
      %p228 = scmp.le.s32.totalorder 1, %s22
      %p229 = scmp.lt.s32.totalorder %s22, 3
      %p230 = pnand %p228, %p229
      %p231 = pneg %p230
      // Predicated region
      $region29: #{tpu_custom_call.1} parent=5 // pred_check
        _
      $region30: #{tpu_custom_call.1} parent=5 // pred_check_branch
        %233 = sbr.rel (%p230) target = $region32
      $region31: #{tpu_custom_call.1} parent=5 // pred_region
        %s234 = ssub.s32 %s22, 1
        %s235 = smul.u32 16, %s27
        %p236 = scmp.lt.s32.totalorder %s235, 31
        %s237 = scalar_select %p236, %s235, 31
        %s238 = smul.addr %s237, 8
        %s239 = scalar_lea.vmem %s0, %s238
        %p240 = pneg %p48
        %p241 = pneg %p45
        %p242 = pneg %p69
        %p243 = pneg %p66
        %p244 = pneg %p90
        %p245 = pneg %p87
        %p246 = pneg %p116
        %p247 = pneg %p113
        %s248 = sand.u32 %s103, 1
        %s249 = scalar_lea.sflag [#allocation3], %s248
        %s250 = sand.u32 %s103, 1
        %s251 = smul.addr %s250, 8
        %s252 = scalar_lea.vmem [#allocation2], %s251
        %p253 = pneg %p142
        %p254 = pneg %p139
        %s255 = sand.u32 %s27, 1
        %s256 = scalar_lea.sflag [#allocation5], %s255
        %s257 = sand.u32 %s129, 1
        %s258 = smul.addr %s257, 2
        %s259 = scalar_lea.vmem [#allocation4], %s258
        %p260 = pneg %p168
        %p261 = pneg %p165
        %s262 = sand.u32 %s27, 1
        %s263 = scalar_lea.sflag [#allocation5], %s262
        %s264 = sand.u32 %s155, 1
        %s265 = smul.addr %s264, 2
        %s266 = scalar_lea.vmem [#allocation6], %s265
        %p267 = pneg %p194
        %p268 = pneg %p191
        %s269 = sand.u32 %s181, 1
        %s270 = scalar_lea.sflag [#allocation8], %s269
        %s271 = sand.u32 %s181, 1
        %s272 = smul.addr %s271, 4
        %s273 = scalar_lea.vmem [#allocation7], %s272
        %s274 = smul.u32 16, %s27
        %p275 = scmp.lt.s32.totalorder %s274, 31
        %s276 = scalar_select %p275, %s274, 31
        %s277 = smul.addr %s276, 8
        %s278 = scalar_lea.vmem %s0, %s277
        %s279 = smul.u32 16, %s27
        %v282 = vld [vmem:[%s278] sm:$0xff]
        %v283 = vld [vmem:[%s278 + $0x8] sm:$0xff]
        %v284 = vld [vmem:[%s278 + $0x10] sm:$0xff]
        %v285 = vld [vmem:[%s278 + $0x18] sm:$0xff]
        %v286 = vld [vmem:[%s278 + $0x20] sm:$0xff]
        %v287 = vld [vmem:[%s278 + $0x28] sm:$0xff]
        %v288 = vld [vmem:[%s278 + $0x30] sm:$0xff]
        %v289 = vld [vmem:[%s278 + $0x38] sm:$0xff]
        %v290 = vld [vmem:[%s278 + $0x40] sm:$0xff]
        %v291 = vld [vmem:[%s278 + $0x48] sm:$0xff]
        %v292 = vld [vmem:[%s278 + $0x50] sm:$0xff]
        %v293 = vld [vmem:[%s278 + $0x58] sm:$0xff]
        %v294 = vld [vmem:[%s278 + $0x60] sm:$0xff]
        %v295 = vld [vmem:[%s278 + $0x68] sm:$0xff]
        %v296 = vld [vmem:[%s278 + $0x70] sm:$0xff]
        %v297 = vld [vmem:[%s278 + $0x78] sm:$0xff]
        %v298 = vld [vmem:[%s1] sm:$0xff]
        %v299 = vld [vmem:[%s2] sm:$0xff]
        %301 = vset.pattern.permute.xlu0 0
        %302 = vperm.xlu0 %301, %v299
        %v303 = vpop.permute.xlu0 %302
        %vm305 = vcmask 261120
        %v307 = vsel %vm305, %v298, 0
        %v310 = vsel %vm305, %v282, 0
        %v313 = vsel %vm305, %v283, 0
        %v316 = vsel %vm305, %v284, 0
        %v319 = vsel %vm305, %v285, 0
        %v322 = vsel %vm305, %v286, 0
        %v325 = vsel %vm305, %v287, 0
        %v328 = vsel %vm305, %v288, 0
        %v331 = vsel %vm305, %v289, 0
        %v334 = vsel %vm305, %v290, 0
        %v337 = vsel %vm305, %v291, 0
        %v340 = vsel %vm305, %v292, 0
        %v343 = vsel %vm305, %v293, 0
        %v346 = vsel %vm305, %v294, 0
        %v349 = vsel %vm305, %v295, 0
        %v352 = vsel %vm305, %v296, 0
        %v355 = vsel %vm305, %v297, 0
        %357 = vmatpush.xpose.msra.mxu0 %v355
        %358 = vmatpush.xpose.msra.mxu0 %v352
        %359 = vmatpush.xpose.msra.mxu0 %v349
        %360 = vmatpush.xpose.msra.mxu0 %v346
        %361 = vmatpush.xpose.msra.mxu0 %v343
        %362 = vmatpush.xpose.msra.mxu0 %v340
        %363 = vmatpush.xpose.msra.mxu0 %v337
        %364 = vmatpush.xpose.msra.mxu0 %v334
        %365 = vmatpush.xpose.msra.mxu0 %v331
        %366 = vmatpush.xpose.msra.mxu0 %v328
        %367 = vmatpush.xpose.msra.mxu0 %v325
        %368 = vmatpush.xpose.msra.mxu0 %v322
        %369 = vmatpush.xpose.msra.mxu0 %v319
        %370 = vmatpush.xpose.msra.mxu0 %v316
        %371 = vmatpush.xpose.msra.mxu0 %v313
        %372 = vmatpush.xpose.msra.mxu0 %v310
        %373 = vmatmul.f32.gmra.mxu0 %v307
        %v374 = vpop.f32.mrf.mxu0
        %v375 = vadd.f32 %v303, %v374
        %376 = vdwg.mxu0
        %377 = vst [vmem:[%s252] sm:$0xff] %v375
        %v378 = vlaneseq
        %v379 = vshrl.u32 %v378, 7
        %v380 = vrot.slane %v375, 4
        %v381 = vmax.f32 %v375, %v380
        %v382 = vrot.slane %v381, 2
        %v383 = vmax.f32 %v381, %v382
        %v384 = vrot.slane %v383, 1
        %v385 = vmax.f32 %v383, %v384
        %vm386 = vcmp.eq.f32.partialorder %v375, %v385
        %v387 = vsel %vm386, %v379, 8
        %v388 = vrot.slane %v387, 4
        %vm389 = vcmp.lt.s32.totalorder %v387, %v388
        %v390 = vsel %vm389, %v387, %v388
        %v391 = vrot.slane %v390, 2
        %vm392 = vcmp.lt.s32.totalorder %v390, %v391
        %v393 = vsel %vm392, %v390, %v391
        %v394 = vrot.slane %v393, 1
        %vm395 = vcmp.lt.s32.totalorder %v393, %v394
        %v396 = vsel %vm395, %v393, %v394
        %vm397 = vcmp.eq.s32.totalorder %v379, %v396
        %v398 = vsel %vm397, -inf, %v375
        %v399 = vrot.slane %v398, 4
        %v400 = vmax.f32 %v398, %v399
        %v401 = vrot.slane %v400, 2
        %v402 = vmax.f32 %v400, %v401
        %v403 = vrot.slane %v402, 1
        %v404 = vmax.f32 %v402, %v403
        %vm405 = vcmp.eq.f32.partialorder %v398, %v404
        %v406 = vsel %vm405, %v379, 8
        %v407 = vrot.slane %v406, 4
        %vm408 = vcmp.lt.s32.totalorder %v406, %v407
        %v409 = vsel %vm408, %v406, %v407
        %v410 = vrot.slane %v409, 2
        %vm411 = vcmp.lt.s32.totalorder %v409, %v410
        %v412 = vsel %vm411, %v409, %v410
        %v413 = vrot.slane %v412, 1
        %vm414 = vcmp.lt.s32.totalorder %v412, %v413
        %v415 = vsel %vm414, %v412, %v413
        %v416 = vsub.f32 %v385, %v385
        %v417 = vmul.f32 %v416, 1.442695
        %v418 = vpow.pop %v417
        %v419 = vsub.f32 %v404, %v385
        %v420 = vmul.f32 %v419, 1.442695
        %v421 = vpow.pop %v420
        %v422 = vadd.f32 %v418, %v421
        %v423 = vrcp.pop %v422
        %v424 = vmul.f32 %v422, %v423
        %v425 = vsub.f32 1.0, %v424
        %v426 = vmul.f32 %v423, %v425
        %v427 = vadd.f32 %v423, %v426
        %vm428 = vweird.f32 %v422
        %vm429 = vweird.f32 %v423
        %vm430 = vmor %vm428, %vm429
        %v431 = vsel %vm430, %v423, %v427
        %v432 = vand.u32 2147483647, %v422
        %vm433 = vcmp.eq.f32.partialorder %v432, 8.507059e+37
        %v434 = vand.u32 %v422, 2147483648
        %v435 = vor.u32 1.1754944e-38, %v434
        %v436 = vsel %vm433, %v435, %v431
        %v437 = vmul.f32 1.0, %v436
        %v438 = vmul.f32 %v418, %v437
        %v439 = vmul.f32 %v421, %v437
        %vm440 = vcmask 1040384
        %v441 = vsel %vm440, %v438, %v439
        %442 = vst [vmem:[%s259] sm:$0x3] %v441
        %v443 = vsel %vm440, %v396, %v415
        %444 = vst [vmem:[%s266] sm:$0x3] %v443
        %v445 = vadd.s32 %v379, 8
        %v446 = vmul.u32 %v443, 2
        %v447 = vadd.s32 %v446, %v379
        %v448 = vperm.slane %v447, 0
        %vm449 = vcmp.eq.s32.totalorder %v379, %v448
        %vm450 = vcmp.eq.s32.totalorder %v445, %v448
        %v451 = vperm.slane %v447, 1
        %vm452 = vcmp.eq.s32.totalorder %v379, %v451
        %vm453 = vcmp.eq.s32.totalorder %v445, %v451
        %vm454 = vmor %vm449, %vm452
        %vm455 = vmor %vm450, %vm453
        %vm456 = vmpackc.low %vm455, %vm454
        %v457 = vsel %vm456, 16711935, 0
        %v458 = vsel %vm456, 16711935, 0
        %v459 = vpack.c.b8 %v458, %v457
        %vm460 = vnez %v459
        %v461 = vsel %vm460, 16843009, 0
        %v462 = vunpack.c.0.s8 %v461
        %v463 = vunpack.c.1.s8 %v461
        %v464 = vpack.c.b16 %v462, %v462
        %v465 = vpack.c.b8 %v464, %v464
        %v466 = vpack.c.b16 %v463, %v463
        %v467 = vpack.c.b8 %v466, %v466
        %468 = vst [vmem:[%s273] sm:$0x3] %v465
        %469 = vst [vmem:[%s273 + $0x2] sm:$0x3] %v467
        %s470 = sand.u32 %s103, 1
        %s471 = scalar_lea.sflag [#allocation3], %s470
        %s472 = sand.u32 %s103, 1
        %s473 = smul.addr %s472, 8
        %s474 = scalar_lea.vmem [#allocation2], %s473
        %s475 = sand.u32 %s27, 1
        %s476 = scalar_lea.sflag [#allocation5], %s475
        %s477 = sand.u32 %s129, 1
        %s478 = smul.addr %s477, 2
        %s479 = scalar_lea.vmem [#allocation4], %s478
        %s480 = sand.u32 %s27, 1
        %s481 = scalar_lea.sflag [#allocation5], %s480
        %s482 = sand.u32 %s155, 1
        %s483 = smul.addr %s482, 2
        %s484 = scalar_lea.vmem [#allocation6], %s483
        %s485 = sand.u32 %s181, 1
        %s486 = scalar_lea.sflag [#allocation8], %s485
        %s487 = sand.u32 %s181, 1
        %s488 = smul.addr %s487, 4
        %s489 = scalar_lea.vmem [#allocation7], %s488
        // Predicated region
        $region33: #{tpu_custom_call.1} parent=31 // pred_check
          %p490 = pneg %p113
        $region34: #{tpu_custom_call.1} parent=31 // pred_check_branch
          %492 = sbr.rel (%p490) target = $region36
        $region35: #{tpu_custom_call.1} parent=31 // pred_region
          %494 = vsyncadd %s471, 0
          %s495 = smul.addr %s27, 8
          %s496 = scalar_lea.hbm %s3, %s495
          %s498 = sshll.u32 %s474, 4
          %s499 = int_to_ptr.vmem [resolvable:$true] %s498
          %s500 = sshll.u32 %s496, 4
          %s501 = int_to_ptr.hbm [resolvable:$true] %s500
          %503 = dma.vmem_to_hbm [thread:$0]  %s499, 128, %s501, %s471
        $region36: #{tpu_custom_call.1} parent=31 // pred_fallthru
          _
        // Predicated region
        $region37: #{tpu_custom_call.1} parent=31 // pred_check
          %p504 = pneg %p139
        $region38: #{tpu_custom_call.1} parent=31 // pred_check_branch
          %506 = sbr.rel (%p504) target = $region40
        $region39: #{tpu_custom_call.1} parent=31 // pred_region
          %508 = vsyncadd %s476, 0
          %s509 = smul.addr %s27, 2
          %s510 = scalar_lea.hbm %s4, %s509
          %s512 = sshll.u32 %s479, 4
          %s513 = int_to_ptr.vmem [resolvable:$true] %s512
          %s514 = sshll.u32 %s510, 4
          %s515 = int_to_ptr.hbm [resolvable:$true] %s514
          %517 = dma.vmem_to_hbm [thread:$0]  %s513, 32, %s515, %s476
        $region40: #{tpu_custom_call.1} parent=31 // pred_fallthru
          _
        // Predicated region
        $region41: #{tpu_custom_call.1} parent=31 // pred_check
          %p518 = pneg %p165
        $region42: #{tpu_custom_call.1} parent=31 // pred_check_branch
          %520 = sbr.rel (%p518) target = $region44
        $region43: #{tpu_custom_call.1} parent=31 // pred_region
          %522 = vsyncadd %s481, 0
          %s523 = smul.addr %s27, 2
          %s524 = scalar_lea.hbm %s5, %s523
          %s526 = sshll.u32 %s484, 4
          %s527 = int_to_ptr.vmem [resolvable:$true] %s526
          %s528 = sshll.u32 %s524, 4
          %s529 = int_to_ptr.hbm [resolvable:$true] %s528
          %531 = dma.vmem_to_hbm [thread:$0]  %s527, 32, %s529, %s481
        $region44: #{tpu_custom_call.1} parent=31 // pred_fallthru
          _
        // Predicated region
        $region45: #{tpu_custom_call.1} parent=31 // pred_check
          %p532 = pneg %p191
        $region46: #{tpu_custom_call.1} parent=31 // pred_check_branch
          %534 = sbr.rel (%p532) target = $region48
        $region47: #{tpu_custom_call.1} parent=31 // pred_region
          %536 = vsyncadd %s486, 0
          %s537 = smul.addr %s27, 2
          %s538 = scalar_lea.hbm %s6, %s537
          %s539 = sshll.u32 %s489, 4
          %s540 = int_to_ptr.vmem [resolvable:$true] %s539
          %s541 = sshll.u32 %s538, 4
          %s542 = int_to_ptr.hbm [resolvable:$true] %s541
          %547 = dma.vmem_to_hbm [thread:$0]  %s540, 64, %s542, %s486, 32, 64, 2
        $region48: #{tpu_custom_call.1} parent=31 // pred_fallthru
          _
      $region32: #{tpu_custom_call.1} parent=5 // pred_fallthru
        _
      %p548 = scmp.le.s32.totalorder 2, %s22
      // Predicated region
      $region49: #{tpu_custom_call.1} parent=5 // pred_check
        %p549 = pneg %p548
      $region50: #{tpu_custom_call.1} parent=5 // pred_check_branch
        %551 = sbr.rel (%p549) target = $region52
      $region51: #{tpu_custom_call.1} parent=5 // pred_region
        %s552 = ssub.s32 %s22, 2
        // Predicated region
        $region53: #{tpu_custom_call.1} parent=51 // pred_check
          %p553 = pneg %p119
        $region54: #{tpu_custom_call.1} parent=51 // pred_check_branch
          %555 = sbr.rel (%p553) target = $region56
        $region55: #{tpu_custom_call.1} parent=51 // pred_region
          %s556 = sand.u32 %s104, 1
          %s557 = scalar_lea.sflag [#allocation3], %s556
          %s558 = sand.u32 %s104, 1
          %s559 = smul.addr %s558, 8
          %s560 = scalar_lea.vmem [#allocation2], %s559
          %562 = dma.done %s557, 128
        $region56: #{tpu_custom_call.1} parent=51 // pred_fallthru
          _
        // Predicated region
        $region57: #{tpu_custom_call.1} parent=51 // pred_check
          %p563 = pneg %p145
        $region58: #{tpu_custom_call.1} parent=51 // pred_check_branch
          %565 = sbr.rel (%p563) target = $region60
        $region59: #{tpu_custom_call.1} parent=51 // pred_region
          %s566 = sand.u32 %s28, 1
          %s567 = scalar_lea.sflag [#allocation5], %s566
          %s568 = sand.u32 %s130, 1
          %s569 = smul.addr %s568, 2
          %s570 = scalar_lea.vmem [#allocation4], %s569
          %572 = dma.done %s567, 32
        $region60: #{tpu_custom_call.1} parent=51 // pred_fallthru
          _
        // Predicated region
        $region61: #{tpu_custom_call.1} parent=51 // pred_check
          %p573 = pneg %p171
        $region62: #{tpu_custom_call.1} parent=51 // pred_check_branch
          %575 = sbr.rel (%p573) target = $region64
        $region63: #{tpu_custom_call.1} parent=51 // pred_region
          %s576 = sand.u32 %s28, 1
          %s577 = scalar_lea.sflag [#allocation5], %s576
          %s578 = sand.u32 %s156, 1
          %s579 = smul.addr %s578, 2
          %s580 = scalar_lea.vmem [#allocation6], %s579
          %582 = dma.done %s577, 32
        $region64: #{tpu_custom_call.1} parent=51 // pred_fallthru
          _
        // Predicated region
        $region65: #{tpu_custom_call.1} parent=51 // pred_check
          %p583 = pneg %p197
        $region66: #{tpu_custom_call.1} parent=51 // pred_check_branch
          %585 = sbr.rel (%p583) target = $region68
        $region67: #{tpu_custom_call.1} parent=51 // pred_region
          %s586 = sand.u32 %s182, 1
          %s587 = scalar_lea.sflag [#allocation8], %s586
          %s588 = sand.u32 %s182, 1
          %s589 = smul.addr %s588, 4
          %s590 = scalar_lea.vmem [#allocation7], %s589
          %592 = dma.done %s587, 64
        $region68: #{tpu_custom_call.1} parent=51 // pred_fallthru
          _
      $region52: #{tpu_custom_call.1} parent=5 // pred_fallthru
        _
    $region6: #{tpu_custom_call.1} parent=1 // loop_footer
      %s26 = sadd.s32 1, %s22
    $region7: #{tpu_custom_call.1} parent=1 // loop_footer_branch
      %21 = sbr.rel target = $region3
    $region8: #{tpu_custom_call.1} parent=1 // loop_exit
      _
    %593 = vsyncpa [#allocation3], 1
    %s594 = scalar_lea.sflag [#allocation3], 1
    %595 = vsyncpa %s594, 1
    %596 = vsyncpa [#allocation5], 1
    %s597 = scalar_lea.sflag [#allocation5], 1
    %598 = vsyncpa %s597, 1
    %599 = vsyncpa [#allocation8], 1
    %s600 = scalar_lea.sflag [#allocation8], 1
    %601 = vsyncpa %s600, 1

</llo_original>
